<compile_context>
chip_gen: v7x
topology: tpu7x:2x2x1
jax: 0.10.0
libtpu: 0.0.40
codegen_flags: <defaults>
</compile_context>

<pallas_src>
import functools

import jax
import jax.numpy as jnp
from jax.experimental import pallas as pl
from jax.experimental.pallas import tpu as pltpu


def _round_up(v, m):
    return ((v + m - 1) // m) * m


def _tpu_generation():
    try:
        kind = jax.devices()[0].device_kind.lower()
    except Exception:
        return None
    for g in ("v7", "v6", "v5"):
        if g in kind:
            return g
    return None


def _vmem_cap_bytes():
    cap = None
    try:
        cap = int(pltpu.get_tpu_info().vmem_capacity_bytes)
    except Exception:
        cap = None
    if not cap or cap <= 0:
        cap = (64 << 20) if _tpu_generation() == "v7" else (128 << 20)
    # Leave pipelining-slack / compiler-scratch headroom (~8 MiB).
    return min(cap * 7 // 8, cap - (8 << 20))


def _pick_dp(d, p_dt):
    """Lane-dense feature padding.  bf16 on v6e/v7x prefers 256 multiples
    (MXU-native 256x256 tile) when the extra pad is cheap; v5e / f32 stay at
    128 multiples."""
    dp128 = _round_up(max(d, 128), 128)
    if jnp.dtype(p_dt).itemsize >= 4 or d <= 128 or _tpu_generation() == "v5":
        return dp128
    dp256 = _round_up(d, 256)
    return dp256 if dp256 * 4 <= dp128 * 5 else dp128   # <=25% extra pad


def _pick_batch_tile(n, dp, itemsize):
    """Batch tile: multiple of 16 (bf16 packs 2 rows/sublane) or 8 (f32);
    bigger tiles for small dp (per-step overhead bound); always >=2 grid steps
    when possible so both v7x TensorCores get work."""
    min_tile = 16 if itemsize < 4 else 8
    if dp <= 512:
        target = 512
    elif dp <= 1024:
        target = 256
    else:
        target = 128
    if n < 2 * min_tile:
        return n                              # single full-dim block (legal)
    return max(min_tile, min(target, _round_up(pl.cdiv(n, 2), min_tile)))


def _feature_tile(dim):
    for t in (512, 256, 128):
        if dim % t == 0:
            return t
    return dim


# --------------------------------------------------------------------------
# Fused kernel: all four weight matrices VMEM-resident, one grid axis (batch).
# --------------------------------------------------------------------------
def _ff_fused_kernel(x_ref, w1_ref, b1_ref, w2_ref, b2_ref, w3_ref, b3_ref,
                     ws_ref, bs_ref, o_ref):
    cdt = w1_ref.dtype                       # MXU operand dtype (bf16 or f32)
    x = x_ref[...].astype(cdt)

    h = jnp.dot(x, w1_ref[...], preferred_element_type=jnp.float32) + b1_ref[...]
    h = jnp.maximum(h, 0.0)
    h = jnp.dot(h.astype(cdt), w2_ref[...], preferred_element_type=jnp.float32) + b2_ref[...]
    h = jnp.maximum(h, 0.0)
    h = jnp.dot(h.astype(cdt), w3_ref[...], preferred_element_type=jnp.float32) + b3_ref[...]
    h = jnp.maximum(h, 0.0)

    s = jnp.dot(x, ws_ref[...], preferred_element_type=jnp.float32) + bs_ref[...]
    o_ref[...] = (h + s).astype(o_ref.dtype)


# --------------------------------------------------------------------------
# Large-dp fallback: per-layer (M, N, K)-tiled linear with f32 accumulator.
# --------------------------------------------------------------------------
def _linear_kernel(*refs, relu, residual):
    if residual:
        x_ref, w_ref, b_ref, r_ref, o_ref, acc_ref = refs
    else:
        x_ref, w_ref, b_ref, o_ref, acc_ref = refs
        r_ref = None
    k = pl.program_id(2)

    @pl.when(k == 0)
    def _():
        acc_ref[...] = jnp.zeros_like(acc_ref)

    acc_ref[...] += jnp.dot(x_ref[...], w_ref[...],
                            preferred_element_type=jnp.float32)

    @pl.when(k == pl.num_programs(2) - 1)
    def _():
        h = acc_ref[...] + b_ref[...]
        if relu:
            h = jnp.maximum(h, 0.0)
        if residual:
            h = h + r_ref[...].astype(jnp.float32)
        o_ref[...] = h.astype(o_ref.dtype)


def _tiled_linear(x, wt, b, residual=None, *, relu, out_dtype, vmem_cap):
    m, kd = x.shape
    nd = wt.shape[1]
    tm = _pick_batch_tile(m, max(kd, nd), x.dtype.itemsize)
    tk = _feature_tile(kd)          # must divide kd (kd is a 128/256 multiple)
    tn = _feature_tile(nd)
    grid = (pl.cdiv(m, tm), nd // tn, kd // tk)

    in_specs = [
        pl.BlockSpec((tm, tk), lambda i, j, k: (i, k)),
        pl.BlockSpec((tk, tn), lambda i, j, k: (k, j)),
        pl.BlockSpec((1, tn), lambda i, j, k: (0, j)),
    ]
    args = [x, wt, b]
    if residual is not None:
        in_specs.append(pl.BlockSpec((tm, tn), lambda i, j, k: (i, j)))
        args.append(residual)

    return pl.pallas_call(
        functools.partial(_linear_kernel, relu=relu,
                          residual=residual is not None),
        out_shape=jax.ShapeDtypeStruct((m, nd), out_dtype),
        grid_spec=pltpu.PrefetchScalarGridSpec(
            num_scalar_prefetch=0,
            grid=grid,
            in_specs=in_specs,
            out_specs=pl.BlockSpec((tm, tn), lambda i, j, k: (i, j)),
            scratch_shapes=[pltpu.VMEM((tm, tn), jnp.float32)],
        ),
        compiler_params=pltpu.CompilerParams(
            dimension_semantics=("parallel", "parallel", "arbitrary"),
            vmem_limit_bytes=int(min(vmem_cap, 64 << 20))),
    )(*args)


# --------------------------------------------------------------------------
# Wrapper
# --------------------------------------------------------------------------
@functools.partial(
    jax.jit,
    static_argnames=("param_dtype", "single_buffer_weights", "force_tiled"))
def ff_forward(x, params, param_dtype=jnp.bfloat16,
               single_buffer_weights=True, force_tiled=False):
    """x: [N, D].  params: PyTorch-layout weights (W [out,in], b [out]).

    D is zero-padded to a lane-dense multiple (exact: padded rows/cols/biases
    are zero and ReLU(0)=0); output is sliced back to [N, D].
    """
    n, d = x.shape
    p_dt = jnp.dtype(param_dtype)
    p_bytes = p_dt.itemsize
    out_bytes = x.dtype.itemsize

    dp = _pick_dp(d, p_dt)
    pad = dp - d
    cap = _vmem_cap_bytes()

    def prep_w(w):
        wt = w.T.astype(p_dt)
        return jnp.pad(wt, ((0, pad), (0, pad))) if pad else wt

    def prep_b(b):
        b = b.astype(jnp.float32)                 # biases stay f32 (tiny)
        if pad:
            b = jnp.pad(b, ((0, pad),))
        return b.reshape(1, dp)

    w1t, w2t, w3t, wst = (prep_w(params[k]) for k in ("w1", "w2", "w3", "ws"))
    b1, b2, b3, bs = (prep_b(params[k]) for k in ("b1", "b2", "b3", "bs"))

    x_k = x.astype(p_dt)
    if pad:
        x_k = jnp.pad(x_k, ((0, 0), (0, pad)))

    tn = _pick_batch_tile(n, dp, p_bytes)
    w_bufs = 1 if single_buffer_weights else 2
    vmem_est = (w_bufs * (4 * dp * dp * p_bytes + 4 * dp * 4)
                + 2 * tn * dp * p_bytes           # x tile, double-buffered
                + 2 * tn * dp * out_bytes         # out tile, double-buffered
                + 6 * tn * dp * 4)                # f32 intermediates headroom

    if force_tiled or vmem_est + (4 << 20) > cap:
        # Weights can't be VMEM-resident in one block on this generation:
        # per-layer (M,N,K)-tiled matmuls, residual add fused into last call.
        h = _tiled_linear(x_k, w1t, b1, relu=True, out_dtype=p_dt, vmem_cap=cap)
        h = _tiled_linear(h, w2t, b2, relu=True, out_dtype=p_dt, vmem_cap=cap)
        h = _tiled_linear(h, w3t, b3, relu=True, out_dtype=p_dt, vmem_cap=cap)
        out_p = _tiled_linear(x_k, wst, bs, residual=h, relu=False,
                              out_dtype=x.dtype, vmem_cap=cap)
        return out_p[:, :d] if pad else out_p

    # Constant index map -> weights fetched once; single-buffer halves VMEM.
    if single_buffer_weights:
        w_spec = pl.BlockSpec((dp, dp), lambda i: (0, 0),
                              pipeline_mode=pl.Buffered(1))
        b_spec = pl.BlockSpec((1, dp), lambda i: (0, 0),
                              pipeline_mode=pl.Buffered(1))
    else:
        w_spec = pl.BlockSpec((dp, dp), lambda i: (0, 0))
        b_spec = pl.BlockSpec((1, dp), lambda i: (0, 0))

    vmem_limit = int(min(cap, max(vmem_est + (4 << 20), 32 << 20)))

    cost = pl.CostEstimate(
        flops=4 * 2 * n * dp * dp + 5 * n * dp,
        transcendentals=0,
        bytes_accessed=(n * dp * (p_bytes + out_bytes)       # x read + out write
                        + 4 * dp * dp * p_bytes + 4 * dp * 4))

    out_p = pl.pallas_call(
        _ff_fused_kernel,
        out_shape=jax.ShapeDtypeStruct((n, dp), x.dtype),
        grid_spec=pltpu.PrefetchScalarGridSpec(
            num_scalar_prefetch=0,
            grid=(pl.cdiv(n, tn),),
            in_specs=[
                pl.BlockSpec((tn, dp), lambda i: (i, 0)),     # x tile
                w_spec, b_spec,                               # layer 1
                w_spec, b_spec,                               # layer 2
                w_spec, b_spec,                               # layer 3
                w_spec, b_spec,                               # shortcut
            ],
            out_specs=pl.BlockSpec((tn, dp), lambda i: (i, 0)),
        ),
        compiler_params=pltpu.CompilerParams(
            dimension_semantics=("parallel",),
            vmem_limit_bytes=vmem_limit),
        cost_estimate=cost,
    )(x_k, w1t, b1, w2t, b2, w3t, b3, wst, bs)

    return out_p[:, :d] if pad else out_p


# --------------------------------------------------------------------------
# Reference / init / driver
# --------------------------------------------------------------------------
def init_ff_params(key, input_dim):
    """Synthetic init mirroring nn.Linear shapes: W [out,in], b [out]."""
    keys = jax.random.split(key, 8)
    scale = 1.0 / jnp.sqrt(input_dim)

    def lin(kw, kb):
        w = jax.random.uniform(kw, (input_dim, input_dim), jnp.float32,
                               minval=-scale, maxval=scale)
        b = jax.random.uniform(kb, (input_dim,), jnp.float32,
                               minval=-scale, maxval=scale)
        return w, b

    w1, b1 = lin(keys[0], keys[1])
    w2, b2 = lin(keys[2], keys[3])
    w3, b3 = lin(keys[4], keys[5])
    ws, bs = lin(keys[6], keys[7])
    return {"w1": w1, "b1": b1, "w2": w2, "b2": b2,
            "w3": w3, "b3": b3, "ws": ws, "bs": bs}


def ff_reference(x, p):
    """Pure-JAX reference matching the PyTorch forward."""
    h = jax.nn.relu(x @ p["w1"].T + p["b1"])
    h = jax.nn.relu(h @ p["w2"].T + p["b2"])
    h = jax.nn.relu(h @ p["w3"].T + p["b3"])
    s = x @ p["ws"].T + p["bs"]
    return h + s


def _run_checked(x, params, ref, tol, **kw):
    """Try single-buffered weights; fall back to double-buffered if the
    Buffered(1) spec is rejected or gives a wrong result."""
    try:
        out = ff_forward(x, params, single_buffer_weights=True, **kw)
        jax.block_until_ready(out)
        if bool(jnp.allclose(out, ref, atol=tol, rtol=tol)):
            return out
    except Exception:
        pass
    out = ff_forward(x, params, single_buffer_weights=False, **kw)
    jax.block_until_ready(out)
    assert bool(jnp.allclose(out, ref, atol=tol, rtol=tol)), \
        "mismatch vs reference"
    return out


if __name__ == "__main__":
    key = jax.random.PRNGKey(0)
    k_x, k_p = jax.random.split(key)

    batch, input_dim = 64, 32
    x = jax.random.normal(k_x, (batch, input_dim), jnp.float32)
    params = init_ff_params(k_p, input_dim)
    ref = ff_reference(x, params)

    # Default path: bf16 MXU operands, f32 accumulation, fused kernel.
    out_bf16 = _run_checked(x, params, ref, tol=7.5e-2)
    assert out_bf16.shape == (batch, input_dim)

    # Opt-in full-precision path (exact vs reference).
    out_f32 = _run_checked(x, params, ref, tol=1e-4, param_dtype=jnp.float32)

    # Exercise the large-dp tiled fallback path (forced at small shape).
    out_tiled = _run_checked(x, params, ref, tol=1e-4,
                             param_dtype=jnp.float32, force_tiled=True)

    print("KERNEL_OK")
</pallas_src>

<mosaic_0001>
module attributes {stable_mosaic.version = 11 : i64} {
  func.func @_ff_fused_kernel(%arg0: i32, %arg1: memref<32x128xbf16, #tpu.memory_space<vmem>>, %arg2: memref<128x128xbf16, #tpu.memory_space<vmem>>, %arg3: memref<1x128xf32, #tpu.memory_space<vmem>>, %arg4: memref<128x128xbf16, #tpu.memory_space<vmem>>, %arg5: memref<1x128xf32, #tpu.memory_space<vmem>>, %arg6: memref<128x128xbf16, #tpu.memory_space<vmem>>, %arg7: memref<1x128xf32, #tpu.memory_space<vmem>>, %arg8: memref<128x128xbf16, #tpu.memory_space<vmem>>, %arg9: memref<1x128xf32, #tpu.memory_space<vmem>>, %arg10: memref<32x128xf32, #tpu.memory_space<vmem>>) attributes {dimension_semantics = [#tpu.dimension_semantics<parallel>], iteration_bounds = array<i64: 2>, scalar_prefetch = 0 : i64, scratch_operands = 0 : i64, tpu.core_type = #tpu.core_type<tc>, window_params = [{transform_indices = @transform_0, window_bounds = array<i64: 32, 128>}, {pipeline_mode = #tpu.pipeline_mode<synchronous>, transform_indices = @transform_1, window_bounds = array<i64: 128, 128>}, {pipeline_mode = #tpu.pipeline_mode<synchronous>, transform_indices = @transform_2, window_bounds = array<i64: 1, 128>}, {pipeline_mode = #tpu.pipeline_mode<synchronous>, transform_indices = @transform_3, window_bounds = array<i64: 128, 128>}, {pipeline_mode = #tpu.pipeline_mode<synchronous>, transform_indices = @transform_4, window_bounds = array<i64: 1, 128>}, {pipeline_mode = #tpu.pipeline_mode<synchronous>, transform_indices = @transform_5, window_bounds = array<i64: 128, 128>}, {pipeline_mode = #tpu.pipeline_mode<synchronous>, transform_indices = @transform_6, window_bounds = array<i64: 1, 128>}, {pipeline_mode = #tpu.pipeline_mode<synchronous>, transform_indices = @transform_7, window_bounds = array<i64: 128, 128>}, {pipeline_mode = #tpu.pipeline_mode<synchronous>, transform_indices = @transform_8, window_bounds = array<i64: 1, 128>}, {transform_indices = @transform_9, window_bounds = array<i64: 32, 128>}]} {
    %c0 = arith.constant 0 : index
    %c0_0 = arith.constant 0 : index
    %0 = vector.load %arg1[%c0, %c0_0] : memref<32x128xbf16, #tpu.memory_space<vmem>>, vector<32x128xbf16>
    %c0_1 = arith.constant 0 : index
    %c0_2 = arith.constant 0 : index
    %1 = vector.load %arg2[%c0_1, %c0_2] : memref<128x128xbf16, #tpu.memory_space<vmem>>, vector<128x128xbf16>
    %cst = arith.constant dense<0.000000e+00> : vector<32x128xf32>
    %2 = tpu.matmul %0, %1, %cst {dimension_numbers = #tpu.dot_dimension_numbers<[1], [0], [0], [1], [0, 0, 1, 1], [], []>} : vector<32x128xbf16>, vector<128x128xbf16>, vector<32x128xf32> -> vector<32x128xf32>
    %c0_3 = arith.constant 0 : index
    %c0_4 = arith.constant 0 : index
    %3 = vector.load %arg3[%c0_3, %c0_4] : memref<1x128xf32, #tpu.memory_space<vmem>>, vector<1x128xf32>
    %4 = vector.broadcast %3 : vector<1x128xf32> to vector<32x128xf32>
    %5 = arith.addf %2, %4 : vector<32x128xf32>
    %cst_5 = arith.constant 0.000000e+00 : f32
    %6 = vector.broadcast %cst_5 : f32 to vector<32x128xf32>
    %7 = arith.maximumf %5, %6 : vector<32x128xf32>
    %8 = arith.truncf %7 : vector<32x128xf32> to vector<32x128xbf16>
    %c0_6 = arith.constant 0 : index
    %c0_7 = arith.constant 0 : index
    %9 = vector.load %arg4[%c0_6, %c0_7] : memref<128x128xbf16, #tpu.memory_space<vmem>>, vector<128x128xbf16>
    %cst_8 = arith.constant dense<0.000000e+00> : vector<32x128xf32>
    %10 = tpu.matmul %8, %9, %cst_8 {dimension_numbers = #tpu.dot_dimension_numbers<[1], [0], [0], [1], [0, 0, 1, 1], [], []>} : vector<32x128xbf16>, vector<128x128xbf16>, vector<32x128xf32> -> vector<32x128xf32>
    %c0_9 = arith.constant 0 : index
    %c0_10 = arith.constant 0 : index
    %11 = vector.load %arg5[%c0_9, %c0_10] : memref<1x128xf32, #tpu.memory_space<vmem>>, vector<1x128xf32>
    %12 = vector.broadcast %11 : vector<1x128xf32> to vector<32x128xf32>
    %13 = arith.addf %10, %12 : vector<32x128xf32>
    %cst_11 = arith.constant 0.000000e+00 : f32
    %14 = vector.broadcast %cst_11 : f32 to vector<32x128xf32>
    %15 = arith.maximumf %13, %14 : vector<32x128xf32>
    %16 = arith.truncf %15 : vector<32x128xf32> to vector<32x128xbf16>
    %c0_12 = arith.constant 0 : index
    %c0_13 = arith.constant 0 : index
    %17 = vector.load %arg6[%c0_12, %c0_13] : memref<128x128xbf16, #tpu.memory_space<vmem>>, vector<128x128xbf16>
    %cst_14 = arith.constant dense<0.000000e+00> : vector<32x128xf32>
    %18 = tpu.matmul %16, %17, %cst_14 {dimension_numbers = #tpu.dot_dimension_numbers<[1], [0], [0], [1], [0, 0, 1, 1], [], []>} : vector<32x128xbf16>, vector<128x128xbf16>, vector<32x128xf32> -> vector<32x128xf32>
    %c0_15 = arith.constant 0 : index
    %c0_16 = arith.constant 0 : index
    %19 = vector.load %arg7[%c0_15, %c0_16] : memref<1x128xf32, #tpu.memory_space<vmem>>, vector<1x128xf32>
    %20 = vector.broadcast %19 : vector<1x128xf32> to vector<32x128xf32>
    %21 = arith.addf %18, %20 : vector<32x128xf32>
    %cst_17 = arith.constant 0.000000e+00 : f32
    %22 = vector.broadcast %cst_17 : f32 to vector<32x128xf32>
    %23 = arith.maximumf %21, %22 : vector<32x128xf32>
    %c0_18 = arith.constant 0 : index
    %c0_19 = arith.constant 0 : index
    %24 = vector.load %arg8[%c0_18, %c0_19] : memref<128x128xbf16, #tpu.memory_space<vmem>>, vector<128x128xbf16>
    %cst_20 = arith.constant dense<0.000000e+00> : vector<32x128xf32>
    %25 = tpu.matmul %0, %24, %cst_20 {dimension_numbers = #tpu.dot_dimension_numbers<[1], [0], [0], [1], [0, 0, 1, 1], [], []>} : vector<32x128xbf16>, vector<128x128xbf16>, vector<32x128xf32> -> vector<32x128xf32>
    %c0_21 = arith.constant 0 : index
    %c0_22 = arith.constant 0 : index
    %26 = vector.load %arg9[%c0_21, %c0_22] : memref<1x128xf32, #tpu.memory_space<vmem>>, vector<1x128xf32>
    %27 = vector.broadcast %26 : vector<1x128xf32> to vector<32x128xf32>
    %28 = arith.addf %25, %27 : vector<32x128xf32>
    %29 = arith.addf %23, %28 : vector<32x128xf32>
    %c0_23 = arith.constant 0 : index
    %c0_24 = arith.constant 0 : index
    %30 = vector.load %arg10[%c0_23, %c0_24] : memref<32x128xf32, #tpu.memory_space<vmem>>, vector<32x128xf32>
    tpu.vector_store %arg10[%c0_23, %c0_24], %29 {strides = array<i32>} : memref<32x128xf32, #tpu.memory_space<vmem>>, vector<32x128xf32>,
    return
  }
  func.func @transform_0(%arg0: i32) -> (i32, i32) {
    %c0_i32 = arith.constant 0 : i32
    %c0_i32_0 = arith.constant 0 : i32
    return %arg0, %c0_i32 : i32, i32
  }
  func.func @transform_1(%arg0: i32) -> (i32, i32) {
    %c0_i32 = arith.constant 0 : i32
    %c0_i32_0 = arith.constant 0 : i32
    %c0_i32_1 = arith.constant 0 : i32
    return %c0_i32, %c0_i32_0 : i32, i32
  }
  func.func @transform_2(%arg0: i32) -> (i32, i32) {
    %c0_i32 = arith.constant 0 : i32
    %c0_i32_0 = arith.constant 0 : i32
    %c0_i32_1 = arith.constant 0 : i32
    return %c0_i32, %c0_i32_0 : i32, i32
  }
  func.func @transform_3(%arg0: i32) -> (i32, i32) {
    %c0_i32 = arith.constant 0 : i32
    %c0_i32_0 = arith.constant 0 : i32
    %c0_i32_1 = arith.constant 0 : i32
    return %c0_i32, %c0_i32_0 : i32, i32
  }
  func.func @transform_4(%arg0: i32) -> (i32, i32) {
    %c0_i32 = arith.constant 0 : i32
    %c0_i32_0 = arith.constant 0 : i32
    %c0_i32_1 = arith.constant 0 : i32
    return %c0_i32, %c0_i32_0 : i32, i32
  }
  func.func @transform_5(%arg0: i32) -> (i32, i32) {
    %c0_i32 = arith.constant 0 : i32
    %c0_i32_0 = arith.constant 0 : i32
    %c0_i32_1 = arith.constant 0 : i32
    return %c0_i32, %c0_i32_0 : i32, i32
  }
  func.func @transform_6(%arg0: i32) -> (i32, i32) {
    %c0_i32 = arith.constant 0 : i32
    %c0_i32_0 = arith.constant 0 : i32
    %c0_i32_1 = arith.constant 0 : i32
    return %c0_i32, %c0_i32_0 : i32, i32
  }
  func.func @transform_7(%arg0: i32) -> (i32, i32) {
    %c0_i32 = arith.constant 0 : i32
    %c0_i32_0 = arith.constant 0 : i32
    %c0_i32_1 = arith.constant 0 : i32
    return %c0_i32, %c0_i32_0 : i32, i32
  }
  func.func @transform_8(%arg0: i32) -> (i32, i32) {
    %c0_i32 = arith.constant 0 : i32
    %c0_i32_0 = arith.constant 0 : i32
    %c0_i32_1 = arith.constant 0 : i32
    return %c0_i32, %c0_i32_0 : i32, i32
  }
  func.func @transform_9(%arg0: i32) -> (i32, i32) {
    %c0_i32 = arith.constant 0 : i32
    %c0_i32_0 = arith.constant 0 : i32
    return %arg0, %c0_i32 : i32, i32
  }
}

module attributes {stable_mosaic.version = 11 : i64} {
  func.func @_ff_fused_kernel(%arg0: i32, %arg1: memref<32x128xbf16, #tpu.memory_space<vmem>>, %arg2: memref<128x128xbf16, #tpu.memory_space<vmem>>, %arg3: memref<1x128xf32, #tpu.memory_space<vmem>>, %arg4: memref<128x128xbf16, #tpu.memory_space<vmem>>, %arg5: memref<1x128xf32, #tpu.memory_space<vmem>>, %arg6: memref<128x128xbf16, #tpu.memory_space<vmem>>, %arg7: memref<1x128xf32, #tpu.memory_space<vmem>>, %arg8: memref<128x128xbf16, #tpu.memory_space<vmem>>, %arg9: memref<1x128xf32, #tpu.memory_space<vmem>>, %arg10: memref<32x128xf32, #tpu.memory_space<vmem>>) attributes {dimension_semantics = [#tpu.dimension_semantics<parallel>], iteration_bounds = array<i64: 2>, scalar_prefetch = 0 : i64, scratch_operands = 0 : i64, tpu.core_type = #tpu.core_type<tc>, window_params = [{transform_indices = @transform_0, window_bounds = array<i64: 32, 128>}, {pipeline_mode = #tpu.pipeline_mode<synchronous>, transform_indices = @transform_1, window_bounds = array<i64: 128, 128>}, {pipeline_mode = #tpu.pipeline_mode<synchronous>, transform_indices = @transform_2, window_bounds = array<i64: 1, 128>}, {pipeline_mode = #tpu.pipeline_mode<synchronous>, transform_indices = @transform_3, window_bounds = array<i64: 128, 128>}, {pipeline_mode = #tpu.pipeline_mode<synchronous>, transform_indices = @transform_4, window_bounds = array<i64: 1, 128>}, {pipeline_mode = #tpu.pipeline_mode<synchronous>, transform_indices = @transform_5, window_bounds = array<i64: 128, 128>}, {pipeline_mode = #tpu.pipeline_mode<synchronous>, transform_indices = @transform_6, window_bounds = array<i64: 1, 128>}, {pipeline_mode = #tpu.pipeline_mode<synchronous>, transform_indices = @transform_7, window_bounds = array<i64: 128, 128>}, {pipeline_mode = #tpu.pipeline_mode<synchronous>, transform_indices = @transform_8, window_bounds = array<i64: 1, 128>}, {transform_indices = @transform_9, window_bounds = array<i64: 32, 128>}]} {
    %c0 = arith.constant 0 : index
    %c0_0 = arith.constant 0 : index
    %0 = vector.load %arg1[%c0, %c0_0] : memref<32x128xbf16, #tpu.memory_space<vmem>>, vector<32x128xbf16>
    %c0_1 = arith.constant 0 : index
    %c0_2 = arith.constant 0 : index
    %1 = vector.load %arg2[%c0_1, %c0_2] : memref<128x128xbf16, #tpu.memory_space<vmem>>, vector<128x128xbf16>
    %cst = arith.constant dense<0.000000e+00> : vector<32x128xf32>
    %2 = tpu.matmul %0, %1, %cst {dimension_numbers = #tpu.dot_dimension_numbers<[1], [0], [0], [1], [0, 0, 1, 1], [], []>} : vector<32x128xbf16>, vector<128x128xbf16>, vector<32x128xf32> -> vector<32x128xf32>
    %c0_3 = arith.constant 0 : index
    %c0_4 = arith.constant 0 : index
    %3 = vector.load %arg3[%c0_3, %c0_4] : memref<1x128xf32, #tpu.memory_space<vmem>>, vector<1x128xf32>
    %4 = vector.broadcast %3 : vector<1x128xf32> to vector<32x128xf32>
    %5 = arith.addf %2, %4 : vector<32x128xf32>
    %cst_5 = arith.constant 0.000000e+00 : f32
    %6 = vector.broadcast %cst_5 : f32 to vector<32x128xf32>
    %7 = arith.maximumf %5, %6 : vector<32x128xf32>
    %8 = arith.truncf %7 : vector<32x128xf32> to vector<32x128xbf16>
    %c0_6 = arith.constant 0 : index
    %c0_7 = arith.constant 0 : index
    %9 = vector.load %arg4[%c0_6, %c0_7] : memref<128x128xbf16, #tpu.memory_space<vmem>>, vector<128x128xbf16>
    %cst_8 = arith.constant dense<0.000000e+00> : vector<32x128xf32>
    %10 = tpu.matmul %8, %9, %cst_8 {dimension_numbers = #tpu.dot_dimension_numbers<[1], [0], [0], [1], [0, 0, 1, 1], [], []>} : vector<32x128xbf16>, vector<128x128xbf16>, vector<32x128xf32> -> vector<32x128xf32>
    %c0_9 = arith.constant 0 : index
    %c0_10 = arith.constant 0 : index
    %11 = vector.load %arg5[%c0_9, %c0_10] : memref<1x128xf32, #tpu.memory_space<vmem>>, vector<1x128xf32>
    %12 = vector.broadcast %11 : vector<1x128xf32> to vector<32x128xf32>
    %13 = arith.addf %10, %12 : vector<32x128xf32>
    %cst_11 = arith.constant 0.000000e+00 : f32
    %14 = vector.broadcast %cst_11 : f32 to vector<32x128xf32>
    %15 = arith.maximumf %13, %14 : vector<32x128xf32>
    %16 = arith.truncf %15 : vector<32x128xf32> to vector<32x128xbf16>
    %c0_12 = arith.constant 0 : index
    %c0_13 = arith.constant 0 : index
    %17 = vector.load %arg6[%c0_12, %c0_13] : memref<128x128xbf16, #tpu.memory_space<vmem>>, vector<128x128xbf16>
    %cst_14 = arith.constant dense<0.000000e+00> : vector<32x128xf32>
    %18 = tpu.matmul %16, %17, %cst_14 {dimension_numbers = #tpu.dot_dimension_numbers<[1], [0], [0], [1], [0, 0, 1, 1], [], []>} : vector<32x128xbf16>, vector<128x128xbf16>, vector<32x128xf32> -> vector<32x128xf32>
    %c0_15 = arith.constant 0 : index
    %c0_16 = arith.constant 0 : index
    %19 = vector.load %arg7[%c0_15, %c0_16] : memref<1x128xf32, #tpu.memory_space<vmem>>, vector<1x128xf32>
    %20 = vector.broadcast %19 : vector<1x128xf32> to vector<32x128xf32>
    %21 = arith.addf %18, %20 : vector<32x128xf32>
    %cst_17 = arith.constant 0.000000e+00 : f32
    %22 = vector.broadcast %cst_17 : f32 to vector<32x128xf32>
    %23 = arith.maximumf %21, %22 : vector<32x128xf32>
    %c0_18 = arith.constant 0 : index
    %c0_19 = arith.constant 0 : index
    %24 = vector.load %arg8[%c0_18, %c0_19] : memref<128x128xbf16, #tpu.memory_space<vmem>>, vector<128x128xbf16>
    %cst_20 = arith.constant dense<0.000000e+00> : vector<32x128xf32>
    %25 = tpu.matmul %0, %24, %cst_20 {dimension_numbers = #tpu.dot_dimension_numbers<[1], [0], [0], [1], [0, 0, 1, 1], [], []>} : vector<32x128xbf16>, vector<128x128xbf16>, vector<32x128xf32> -> vector<32x128xf32>
    %c0_21 = arith.constant 0 : index
    %c0_22 = arith.constant 0 : index
    %26 = vector.load %arg9[%c0_21, %c0_22] : memref<1x128xf32, #tpu.memory_space<vmem>>, vector<1x128xf32>
    %27 = vector.broadcast %26 : vector<1x128xf32> to vector<32x128xf32>
    %28 = arith.addf %25, %27 : vector<32x128xf32>
    %29 = arith.addf %23, %28 : vector<32x128xf32>
    %c0_23 = arith.constant 0 : index
    %c0_24 = arith.constant 0 : index
    %30 = vector.load %arg10[%c0_23, %c0_24] : memref<32x128xf32, #tpu.memory_space<vmem>>, vector<32x128xf32>
    tpu.vector_store %arg10[%c0_23, %c0_24], %29 {strides = array<i32>} : memref<32x128xf32, #tpu.memory_space<vmem>>, vector<32x128xf32>,
    return
  }
  func.func @transform_0(%arg0: i32) -> (i32, i32) {
    %c0_i32 = arith.constant 0 : i32
    %c0_i32_0 = arith.constant 0 : i32
    return %arg0, %c0_i32 : i32, i32
  }
  func.func @transform_1(%arg0: i32) -> (i32, i32) {
    %c0_i32 = arith.constant 0 : i32
    %c0_i32_0 = arith.constant 0 : i32
    %c0_i32_1 = arith.constant 0 : i32
    return %c0_i32, %c0_i32_0 : i32, i32
  }
  func.func @transform_2(%arg0: i32) -> (i32, i32) {
    %c0_i32 = arith.constant 0 : i32
    %c0_i32_0 = arith.constant 0 : i32
    %c0_i32_1 = arith.constant 0 : i32
    return %c0_i32, %c0_i32_0 : i32, i32
  }
  func.func @transform_3(%arg0: i32) -> (i32, i32) {
    %c0_i32 = arith.constant 0 : i32
    %c0_i32_0 = arith.constant 0 : i32
    %c0_i32_1 = arith.constant 0 : i32
    return %c0_i32, %c0_i32_0 : i32, i32
  }
  func.func @transform_4(%arg0: i32) -> (i32, i32) {
    %c0_i32 = arith.constant 0 : i32
    %c0_i32_0 = arith.constant 0 : i32
    %c0_i32_1 = arith.constant 0 : i32
    return %c0_i32, %c0_i32_0 : i32, i32
  }
  func.func @transform_5(%arg0: i32) -> (i32, i32) {
    %c0_i32 = arith.constant 0 : i32
    %c0_i32_0 = arith.constant 0 : i32
    %c0_i32_1 = arith.constant 0 : i32
    return %c0_i32, %c0_i32_0 : i32, i32
  }
  func.func @transform_6(%arg0: i32) -> (i32, i32) {
    %c0_i32 = arith.constant 0 : i32
    %c0_i32_0 = arith.constant 0 : i32
    %c0_i32_1 = arith.constant 0 : i32
    return %c0_i32, %c0_i32_0 : i32, i32
  }
  func.func @transform_7(%arg0: i32) -> (i32, i32) {
    %c0_i32 = arith.constant 0 : i32
    %c0_i32_0 = arith.constant 0 : i32
    %c0_i32_1 = arith.constant 0 : i32
    return %c0_i32, %c0_i32_0 : i32, i32
  }
  func.func @transform_8(%arg0: i32) -> (i32, i32) {
    %c0_i32 = arith.constant 0 : i32
    %c0_i32_0 = arith.constant 0 : i32
    %c0_i32_1 = arith.constant 0 : i32
    return %c0_i32, %c0_i32_0 : i32, i32
  }
  func.func @transform_9(%arg0: i32) -> (i32, i32) {
    %c0_i32 = arith.constant 0 : i32
    %c0_i32_0 = arith.constant 0 : i32
    return %arg0, %c0_i32 : i32, i32
  }
}

</mosaic_0001>

<llo_original>
// kernel: ff_forward.1
$region0: #{ff_forward.1}
  #allocation0 [shape = 'u32[]', space=smem, size = 0x4, offset = 0x4, fixed_abs, tag = 'smem constant byte address 0x4 - core index']
  #allocation1 [shape = 'u32[144,128]{1,0:T(1,128)}', space=vmem, size = 0x12000, scoped, tag = 'internal scratch']
  %s0 = inlined_call_operand.vmem [shape: bf16[64,128], index: 0, kind: input, shape index: {}]
  %s1 = inlined_call_operand.vmem [shape: bf16[128,128], index: 1, kind: input, shape index: {}]
  %s2 = inlined_call_operand.vmem [shape: f32[1,128], index: 2, kind: input, shape index: {}]
  %s3 = inlined_call_operand.vmem [shape: bf16[128,128], index: 3, kind: input, shape index: {}]
  %s4 = inlined_call_operand.vmem [shape: f32[1,128], index: 4, kind: input, shape index: {}]
  %s5 = inlined_call_operand.vmem [shape: bf16[128,128], index: 5, kind: input, shape index: {}]
  %s6 = inlined_call_operand.vmem [shape: f32[1,128], index: 6, kind: input, shape index: {}]
  %s7 = inlined_call_operand.vmem [shape: bf16[128,128], index: 7, kind: input, shape index: {}]
  %s8 = inlined_call_operand.vmem [shape: f32[1,128], index: 8, kind: input, shape index: {}]
  %s9 = inlined_call_operand.vmem [shape: f32[64,128], index: 9, kind: output, shape index: {}]
  %s10 = sld [smem:[#allocation0]]
  $region69: #{ff_forward.1} parent=0
    _
  %s12 = ssub.s32 1, %s10
  %s13 = scalar_select 0, %s12, %s10
  loop: start=0, step=1, limit=4
  $region2: #{ff_forward.1} parent=0 // loop_pre_header
    _
  $region3: #{ff_forward.1} parent=0 // loop_header
    %s15 = sphi 0, %s19
    %p16 = scmp.ge.s32.totalorder %s15, 4
    %s25 = sphi 0, %s27
    %s28 = sphi 0, %s25
    %s29 = sphi 0, %s28
    %s45 = sphi 0, %s29
    %s49 = sphi 0, %s49
    %s51 = sphi 0, %s49
    %s52 = sphi 0, %s51
    %s66 = sphi 0, %s52
    %s70 = sphi 0, %s70
    %s72 = sphi 0, %s70
    %s73 = sphi 0, %s72
    %s87 = sphi 0, %s73
    %s91 = sphi 0, %s91
    %s93 = sphi 0, %s91
    %s94 = sphi 0, %s93
    %s108 = sphi 0, %s94
    %s112 = sphi 0, %s112
    %s114 = sphi 0, %s112
    %s115 = sphi 0, %s114
    %s129 = sphi 0, %s115
    %s133 = sphi 0, %s133
    %s135 = sphi 0, %s133
    %s136 = sphi 0, %s135
    %s150 = sphi 0, %s136
    %s154 = sphi 0, %s154
    %s156 = sphi 0, %s154
    %s157 = sphi 0, %s156
    %s171 = sphi 0, %s157
    %s175 = sphi 0, %s175
    %s177 = sphi 0, %s175
    %s178 = sphi 0, %s177
    %s192 = sphi 0, %s178
    %s196 = sphi 0, %s196
    %s198 = sphi 0, %s196
    %s199 = sphi 0, %s198
    %s213 = sphi 0, %s199
    %s219 = sphi 0, %s221
    %s222 = sphi 0, %s219
    %s223 = sphi 0, %s222
    %s239 = sphi 0, %s223
  $region4: #{ff_forward.1} parent=0 // loop_header_branch
    %18 = sbr.rel (%p16) target = $region8
  $region5: #{ff_forward.1} parent=0 // loop_body
    %s20 = ssub.s32 %s15, 1
    %s21 = ssub.s32 %s15, 2
    %s22 = sadd.s32 %s15, 1
    %s23 = ssub.s32 %s15, %s22
    %p24 = scmp.eq.s32.totalorder %s23, 0
    %s26 = sadd.s32 %s25, 1
    %s27 = scalar_select %p24, %s25, %s26
    %p30 = pneg %p24
    %p31 = scmp.eq.s32.totalorder %s15, 1
    %p32 = por %p30, %p31
    %p33 = scmp.ne.s32.totalorder %s25, %s28
    %p34 = scmp.eq.s32.totalorder %s15, 0
    %p35 = por %p33, %p34
    %p36 = scmp.ne.s32.totalorder %s25, %s28
    %p37 = scmp.eq.s32.totalorder %s20, 1
    %p38 = por %p36, %p37
    %p39 = scmp.ne.s32.totalorder %s28, %s29
    %p40 = scmp.eq.s32.totalorder %s20, 0
    %p41 = por %p39, %p40
    %p42 = scmp.ne.s32.totalorder %s28, %s29
    %p43 = scmp.eq.s32.totalorder %s21, 1
    %p44 = por %p42, %p43
    %p46 = scmp.ne.s32.totalorder %s29, %s45
    %p47 = scmp.eq.s32.totalorder %s21, 0
    %p48 = por %p46, %p47
    %s50 = sadd.s32 %s49, 1
    %p53 = scmp.eq.s32.totalorder %s15, 1
    %p54 = scmp.ne.s32.totalorder %s49, %s51
    %p55 = scmp.eq.s32.totalorder %s15, 0
    %p56 = por %p54, %p55
    %p57 = scmp.ne.s32.totalorder %s49, %s51
    %p58 = scmp.eq.s32.totalorder %s20, 1
    %p59 = por %p57, %p58
    %p60 = scmp.ne.s32.totalorder %s51, %s52
    %p61 = scmp.eq.s32.totalorder %s20, 0
    %p62 = por %p60, %p61
    %p63 = scmp.ne.s32.totalorder %s51, %s52
    %p64 = scmp.eq.s32.totalorder %s21, 1
    %p65 = por %p63, %p64
    %p67 = scmp.ne.s32.totalorder %s52, %s66
    %p68 = scmp.eq.s32.totalorder %s21, 0
    %p69 = por %p67, %p68
    %s71 = sadd.s32 %s70, 1
    %p74 = scmp.eq.s32.totalorder %s15, 1
    %p75 = scmp.ne.s32.totalorder %s70, %s72
    %p76 = scmp.eq.s32.totalorder %s15, 0
    %p77 = por %p75, %p76
    %p78 = scmp.ne.s32.totalorder %s70, %s72
    %p79 = scmp.eq.s32.totalorder %s20, 1
    %p80 = por %p78, %p79
    %p81 = scmp.ne.s32.totalorder %s72, %s73
    %p82 = scmp.eq.s32.totalorder %s20, 0
    %p83 = por %p81, %p82
    %p84 = scmp.ne.s32.totalorder %s72, %s73
    %p85 = scmp.eq.s32.totalorder %s21, 1
    %p86 = por %p84, %p85
    %p88 = scmp.ne.s32.totalorder %s73, %s87
    %p89 = scmp.eq.s32.totalorder %s21, 0
    %p90 = por %p88, %p89
    %s92 = sadd.s32 %s91, 1
    %p95 = scmp.eq.s32.totalorder %s15, 1
    %p96 = scmp.ne.s32.totalorder %s91, %s93
    %p97 = scmp.eq.s32.totalorder %s15, 0
    %p98 = por %p96, %p97
    %p99 = scmp.ne.s32.totalorder %s91, %s93
    %p100 = scmp.eq.s32.totalorder %s20, 1
    %p101 = por %p99, %p100
    %p102 = scmp.ne.s32.totalorder %s93, %s94
    %p103 = scmp.eq.s32.totalorder %s20, 0
    %p104 = por %p102, %p103
    %p105 = scmp.ne.s32.totalorder %s93, %s94
    %p106 = scmp.eq.s32.totalorder %s21, 1
    %p107 = por %p105, %p106
    %p109 = scmp.ne.s32.totalorder %s94, %s108
    %p110 = scmp.eq.s32.totalorder %s21, 0
    %p111 = por %p109, %p110
    %s113 = sadd.s32 %s112, 1
    %p116 = scmp.eq.s32.totalorder %s15, 1
    %p117 = scmp.ne.s32.totalorder %s112, %s114
    %p118 = scmp.eq.s32.totalorder %s15, 0
    %p119 = por %p117, %p118
    %p120 = scmp.ne.s32.totalorder %s112, %s114
    %p121 = scmp.eq.s32.totalorder %s20, 1
    %p122 = por %p120, %p121
    %p123 = scmp.ne.s32.totalorder %s114, %s115
    %p124 = scmp.eq.s32.totalorder %s20, 0
    %p125 = por %p123, %p124
    %p126 = scmp.ne.s32.totalorder %s114, %s115
    %p127 = scmp.eq.s32.totalorder %s21, 1
    %p128 = por %p126, %p127
    %p130 = scmp.ne.s32.totalorder %s115, %s129
    %p131 = scmp.eq.s32.totalorder %s21, 0
    %p132 = por %p130, %p131
    %s134 = sadd.s32 %s133, 1
    %p137 = scmp.eq.s32.totalorder %s15, 1
    %p138 = scmp.ne.s32.totalorder %s133, %s135
    %p139 = scmp.eq.s32.totalorder %s15, 0
    %p140 = por %p138, %p139
    %p141 = scmp.ne.s32.totalorder %s133, %s135
    %p142 = scmp.eq.s32.totalorder %s20, 1
    %p143 = por %p141, %p142
    %p144 = scmp.ne.s32.totalorder %s135, %s136
    %p145 = scmp.eq.s32.totalorder %s20, 0
    %p146 = por %p144, %p145
    %p147 = scmp.ne.s32.totalorder %s135, %s136
    %p148 = scmp.eq.s32.totalorder %s21, 1
    %p149 = por %p147, %p148
    %p151 = scmp.ne.s32.totalorder %s136, %s150
    %p152 = scmp.eq.s32.totalorder %s21, 0
    %p153 = por %p151, %p152
    %s155 = sadd.s32 %s154, 1
    %p158 = scmp.eq.s32.totalorder %s15, 1
    %p159 = scmp.ne.s32.totalorder %s154, %s156
    %p160 = scmp.eq.s32.totalorder %s15, 0
    %p161 = por %p159, %p160
    %p162 = scmp.ne.s32.totalorder %s154, %s156
    %p163 = scmp.eq.s32.totalorder %s20, 1
    %p164 = por %p162, %p163
    %p165 = scmp.ne.s32.totalorder %s156, %s157
    %p166 = scmp.eq.s32.totalorder %s20, 0
    %p167 = por %p165, %p166
    %p168 = scmp.ne.s32.totalorder %s156, %s157
    %p169 = scmp.eq.s32.totalorder %s21, 1
    %p170 = por %p168, %p169
    %p172 = scmp.ne.s32.totalorder %s157, %s171
    %p173 = scmp.eq.s32.totalorder %s21, 0
    %p174 = por %p172, %p173
    %s176 = sadd.s32 %s175, 1
    %p179 = scmp.eq.s32.totalorder %s15, 1
    %p180 = scmp.ne.s32.totalorder %s175, %s177
    %p181 = scmp.eq.s32.totalorder %s15, 0
    %p182 = por %p180, %p181
    %p183 = scmp.ne.s32.totalorder %s175, %s177
    %p184 = scmp.eq.s32.totalorder %s20, 1
    %p185 = por %p183, %p184
    %p186 = scmp.ne.s32.totalorder %s177, %s178
    %p187 = scmp.eq.s32.totalorder %s20, 0
    %p188 = por %p186, %p187
    %p189 = scmp.ne.s32.totalorder %s177, %s178
    %p190 = scmp.eq.s32.totalorder %s21, 1
    %p191 = por %p189, %p190
    %p193 = scmp.ne.s32.totalorder %s178, %s192
    %p194 = scmp.eq.s32.totalorder %s21, 0
    %p195 = por %p193, %p194
    %s197 = sadd.s32 %s196, 1
    %p200 = scmp.eq.s32.totalorder %s15, 1
    %p201 = scmp.ne.s32.totalorder %s196, %s198
    %p202 = scmp.eq.s32.totalorder %s15, 0
    %p203 = por %p201, %p202
    %p204 = scmp.ne.s32.totalorder %s196, %s198
    %p205 = scmp.eq.s32.totalorder %s20, 1
    %p206 = por %p204, %p205
    %p207 = scmp.ne.s32.totalorder %s198, %s199
    %p208 = scmp.eq.s32.totalorder %s20, 0
    %p209 = por %p207, %p208
    %p210 = scmp.ne.s32.totalorder %s198, %s199
    %p211 = scmp.eq.s32.totalorder %s21, 1
    %p212 = por %p210, %p211
    %p214 = scmp.ne.s32.totalorder %s199, %s213
    %p215 = scmp.eq.s32.totalorder %s21, 0
    %p216 = por %p214, %p215
    %s217 = ssub.s32 %s15, %s22
    %p218 = scmp.eq.s32.totalorder %s217, 0
    %s220 = sadd.s32 %s219, 1
    %s221 = scalar_select %p218, %s219, %s220
    %p224 = pneg %p218
    %p225 = scmp.eq.s32.totalorder %s15, 1
    %p226 = por %p224, %p225
    %p227 = scmp.ne.s32.totalorder %s219, %s222
    %p228 = scmp.eq.s32.totalorder %s15, 0
    %p229 = por %p227, %p228
    %p230 = scmp.ne.s32.totalorder %s219, %s222
    %p231 = scmp.eq.s32.totalorder %s20, 1
    %p232 = por %p230, %p231
    %p233 = scmp.ne.s32.totalorder %s222, %s223
    %p234 = scmp.eq.s32.totalorder %s20, 0
    %p235 = por %p233, %p234
    %p236 = scmp.ne.s32.totalorder %s222, %s223
    %p237 = scmp.eq.s32.totalorder %s21, 1
    %p238 = por %p236, %p237
    %p240 = scmp.ne.s32.totalorder %s223, %s239
    %p241 = scmp.eq.s32.totalorder %s21, 0
    %p242 = por %p240, %p241
    %p243 = scmp.le.s32.totalorder 1, %s15
    %p244 = scmp.lt.s32.totalorder %s15, 3
    %p245 = pnand %p243, %p244
    %p246 = pneg %p245
    // Predicated region
    $region9: #{ff_forward.1} parent=5 // pred_check
      _
    $region10: #{ff_forward.1} parent=5 // pred_check_branch
      %248 = sbr.rel (%p245) target = $region12
    $region11: #{ff_forward.1} parent=5 // pred_region
      %s249 = ssub.s32 %s15, 1
      // Predicated region
      $region13: #{ff_forward.1} parent=11 // pred_check
        %p250 = pneg %p62
      $region14: #{ff_forward.1} parent=11 // pred_check_branch
        %252 = sbr.rel (%p250) target = $region16
      $region15: #{ff_forward.1} parent=11 // pred_region
        _
      $region16: #{ff_forward.1} parent=11 // pred_fallthru
        _
      // Predicated region
      $region17: #{ff_forward.1} parent=11 // pred_check
        %p253 = pneg %p83
      $region18: #{ff_forward.1} parent=11 // pred_check_branch
        %255 = sbr.rel (%p253) target = $region20
      $region19: #{ff_forward.1} parent=11 // pred_region
        _
      $region20: #{ff_forward.1} parent=11 // pred_fallthru
        _
      // Predicated region
      $region21: #{ff_forward.1} parent=11 // pred_check
        %p256 = pneg %p104
      $region22: #{ff_forward.1} parent=11 // pred_check_branch
        %258 = sbr.rel (%p256) target = $region24
      $region23: #{ff_forward.1} parent=11 // pred_region
        _
      $region24: #{ff_forward.1} parent=11 // pred_fallthru
        _
      // Predicated region
      $region25: #{ff_forward.1} parent=11 // pred_check
        %p259 = pneg %p125
      $region26: #{ff_forward.1} parent=11 // pred_check_branch
        %261 = sbr.rel (%p259) target = $region28
      $region27: #{ff_forward.1} parent=11 // pred_region
        _
      $region28: #{ff_forward.1} parent=11 // pred_fallthru
        _
      // Predicated region
      $region29: #{ff_forward.1} parent=11 // pred_check
        %p262 = pneg %p146
      $region30: #{ff_forward.1} parent=11 // pred_check_branch
        %264 = sbr.rel (%p262) target = $region32
      $region31: #{ff_forward.1} parent=11 // pred_region
        _
      $region32: #{ff_forward.1} parent=11 // pred_fallthru
        _
      // Predicated region
      $region33: #{ff_forward.1} parent=11 // pred_check
        %p265 = pneg %p167
      $region34: #{ff_forward.1} parent=11 // pred_check_branch
        %267 = sbr.rel (%p265) target = $region36
      $region35: #{ff_forward.1} parent=11 // pred_region
        _
      $region36: #{ff_forward.1} parent=11 // pred_fallthru
        _
      // Predicated region
      $region37: #{ff_forward.1} parent=11 // pred_check
        %p268 = pneg %p188
      $region38: #{ff_forward.1} parent=11 // pred_check_branch
        %270 = sbr.rel (%p268) target = $region40
      $region39: #{ff_forward.1} parent=11 // pred_region
        _
      $region40: #{ff_forward.1} parent=11 // pred_fallthru
        _
      // Predicated region
      $region41: #{ff_forward.1} parent=11 // pred_check
        %p271 = pneg %p209
      $region42: #{ff_forward.1} parent=11 // pred_check_branch
        %273 = sbr.rel (%p271) target = $region44
      $region43: #{ff_forward.1} parent=11 // pred_region
        _
      $region44: #{ff_forward.1} parent=11 // pred_fallthru
        _
    $region12: #{ff_forward.1} parent=5 // pred_fallthru
      _
    %p274 = scmp.lt.s32.totalorder %s15, 2
    // Predicated region
    $region45: #{ff_forward.1} parent=5 // pred_check
      %p275 = pneg %p274
    $region46: #{ff_forward.1} parent=5 // pred_check_branch
      %277 = sbr.rel (%p275) target = $region48
    $region47: #{ff_forward.1} parent=5 // pred_region
      // Predicated region
      $region49: #{ff_forward.1} parent=47 // pred_check
        %p278 = pneg %p35
      $region50: #{ff_forward.1} parent=47 // pred_check_branch
        %280 = sbr.rel (%p278) target = $region52
      $region51: #{ff_forward.1} parent=47 // pred_region
        %s281 = smul.u32 4, %s15
        %p282 = scmp.lt.s32.totalorder %s281, 7
        %s283 = scalar_select %p282, %s281, 7
        %s284 = smul.addr %s283, 4
        %s285 = scalar_lea.vmem %s0, %s284
        %s286 = smul.u32 4, %s15
      $region52: #{ff_forward.1} parent=47 // pred_fallthru
        _
    $region48: #{ff_forward.1} parent=5 // pred_fallthru
      _
    %p287 = scmp.le.s32.totalorder 1, %s15
    %p288 = scmp.lt.s32.totalorder %s15, 3
    %p289 = pnand %p287, %p288
    %p290 = pneg %p289
    // Predicated region
    $region53: #{ff_forward.1} parent=5 // pred_check
      _
    $region54: #{ff_forward.1} parent=5 // pred_check_branch
      %292 = sbr.rel (%p289) target = $region56
    $region55: #{ff_forward.1} parent=5 // pred_region
      %s293 = ssub.s32 %s15, 1
      %s294 = smul.u32 4, %s20
      %p295 = scmp.lt.s32.totalorder %s294, 7
      %s296 = scalar_select %p295, %s294, 7
      %s297 = smul.addr %s296, 4
      %s298 = scalar_lea.vmem %s0, %s297
      %p299 = pneg %p41
      %p300 = pneg %p38
      %p301 = pneg %p62
      %p302 = pneg %p59
      %p303 = pneg %p83
      %p304 = pneg %p80
      %p305 = pneg %p104
      %p306 = pneg %p101
      %p307 = pneg %p125
      %p308 = pneg %p122
      %p309 = pneg %p146
      %p310 = pneg %p143
      %p311 = pneg %p167
      %p312 = pneg %p164
      %p313 = pneg %p188
      %p314 = pneg %p185
      %p315 = pneg %p209
      %p316 = pneg %p206
      %p317 = pneg %p235
      %p318 = pneg %p232
      %s319 = smul.u32 4, %s20
      %p320 = scmp.lt.s32.totalorder %s319, 7
      %s321 = scalar_select %p320, %s319, 7
      %s322 = smul.addr %s321, 8
      %s323 = scalar_lea.vmem %s9, %s322
      %s324 = smul.u32 4, %s20
      %p325 = scmp.lt.s32.totalorder %s324, 7
      %s326 = scalar_select %p325, %s324, 7
      %s327 = smul.addr %s326, 4
      %s328 = scalar_lea.vmem %s0, %s327
      %s329 = smul.u32 4, %s20
      %s330 = smul.u32 4, %s20
      %p331 = scmp.lt.s32.totalorder %s330, 7
      %s332 = scalar_select %p331, %s330, 7
      %s333 = smul.addr %s332, 8
      %s334 = scalar_lea.vmem %s9, %s333
      %s335 = smul.u32 4, %s20
      %v337 = vld [vmem:[%s328] sm:$0xf]
      %v338 = vld [vmem:[%s328 + $0x4] sm:$0xf]
      %v339 = vld [vmem:[%s328 + $0x8] sm:$0xf]
      %v340 = vld [vmem:[%s328 + $0xc] sm:$0xf]
      %v341 = vld [vmem:[%s1] sm:$0xf]
      %v342 = vld [vmem:[%s1 + $0x4] sm:$0xf]
      %v343 = vld [vmem:[%s1 + $0x8] sm:$0xf]
      %v344 = vld [vmem:[%s1 + $0xc] sm:$0xf]
      %v345 = vld [vmem:[%s1 + $0x10] sm:$0xf]
      %v346 = vld [vmem:[%s1 + $0x14] sm:$0xf]
      %v347 = vld [vmem:[%s1 + $0x18] sm:$0xf]
      %v348 = vld [vmem:[%s1 + $0x1c] sm:$0xf]
      %v349 = vld [vmem:[%s1 + $0x20] sm:$0xf]
      %v350 = vld [vmem:[%s1 + $0x24] sm:$0xf]
      %v351 = vld [vmem:[%s1 + $0x28] sm:$0xf]
      %v352 = vld [vmem:[%s1 + $0x2c] sm:$0xf]
      %v353 = vld [vmem:[%s1 + $0x30] sm:$0xf]
      %v354 = vld [vmem:[%s1 + $0x34] sm:$0xf]
      %v355 = vld [vmem:[%s1 + $0x38] sm:$0xf]
      %v356 = vld [vmem:[%s1 + $0x3c] sm:$0xf]
      %v357 = vld [vmem:[%s2] sm:$0x1]
      %v359 = vlaneseq
      %v360 = vshrl.u32 %v359, 7
      %v361 = vsub.s32 0, %v360
      %v362 = vrot.slane %v357, %v361
      %v368 = vunpack.c.l.b16 %v337
      %v369 = vunpack.c.l.b16 %v338
      %v370 = vunpack.c.l.b16 %v339
      %v371 = vunpack.c.l.b16 %v340
      %v372 = vpack.c.b16 %v369, %v368
      %v373 = vpack.c.b16 %v371, %v370
      %v392 = vunpack.c.l.b16 %v341
      %v393 = vunpack.c.l.b16 %v342
      %v394 = vunpack.c.l.b16 %v343
      %v395 = vunpack.c.l.b16 %v344
      %v396 = vunpack.c.l.b16 %v345
      %v397 = vunpack.c.l.b16 %v346
      %v398 = vunpack.c.l.b16 %v347
      %v399 = vunpack.c.l.b16 %v348
      %v400 = vunpack.c.l.b16 %v349
      %v401 = vunpack.c.l.b16 %v350
      %v402 = vunpack.c.l.b16 %v351
      %v403 = vunpack.c.l.b16 %v352
      %v404 = vunpack.c.l.b16 %v353
      %v405 = vunpack.c.l.b16 %v354
      %v406 = vunpack.c.l.b16 %v355
      %v407 = vunpack.c.l.b16 %v356
      %v408 = vpack.c.b16 %v393, %v392
      %v409 = vpack.c.b16 %v395, %v394
      %v410 = vpack.c.b16 %v397, %v396
      %v411 = vpack.c.b16 %v399, %v398
      %v412 = vpack.c.b16 %v401, %v400
      %v413 = vpack.c.b16 %v403, %v402
      %v414 = vpack.c.b16 %v405, %v404
      %v415 = vpack.c.b16 %v407, %v406
      %424 = vmatprep.subr.bf16.mxu0 0
      %425 = vmatpush1.bf16.msra.mxu0 %v408
      %426 = vmatprep.subr.bf16.mxu0 0
      %427 = vmatpush1.bf16.msra.mxu0 %v409
      %428 = vmatprep.subr.bf16.mxu0 0
      %429 = vmatpush1.bf16.msra.mxu0 %v410
      %430 = vmatprep.subr.bf16.mxu0 0
      %431 = vmatpush1.bf16.msra.mxu0 %v411
      %432 = vmatprep.subr.bf16.mxu0 0
      %433 = vmatpush1.bf16.msra.mxu0 %v412
      %434 = vmatprep.subr.bf16.mxu0 0
      %435 = vmatpush1.bf16.msra.mxu0 %v413
      %436 = vmatprep.subr.bf16.mxu0 0
      %437 = vmatpush1.bf16.msra.mxu0 %v414
      %438 = vmatprep.subr.bf16.mxu0 0
      %439 = vmatpush1.bf16.msra.mxu0 %v415
      %440 = vmatprep.subr.bf16.mxu0 0
      %441 = vmatpush1.bf16.msra.mxu0 0
      %442 = vmatprep.subr.bf16.mxu0 0
      %443 = vmatpush1.bf16.msra.mxu0 0
      %444 = vmatprep.subr.bf16.mxu0 0
      %445 = vmatpush1.bf16.msra.mxu0 0
      %446 = vmatprep.subr.bf16.mxu0 0
      %447 = vmatpush1.bf16.msra.mxu0 0
      %448 = vmatprep.subr.bf16.mxu0 0
      %449 = vmatpush1.bf16.msra.mxu0 0
      %450 = vmatprep.subr.bf16.mxu0 0
      %451 = vmatpush1.bf16.msra.mxu0 0
      %452 = vmatprep.subr.bf16.mxu0 0
      %453 = vmatpush1.bf16.msra.mxu0 0
      %454 = vmatprep.subr.bf16.mxu0 0
      %455 = vmatpush1.bf16.msra.mxu0 0
      %456 = vmatprep.mubr.bf16.mxu0 0
      %457 = vmatmul.mubr.bf16.gmra.mrb[0].mxu0 %v372
      %v458 = vpop.f32.mrb[0].mxu0
      %v459 = vadd.f32 %v362, %v458
      %v460 = vpop.f32.mrb[0].mxu0
      %v461 = vpop.f32.mrb[0].mxu0
      %v462 = vadd.f32 %v362, %v461
      %v463 = vpop.f32.mrb[0].mxu0
      %464 = vmatprep.mubr.bf16.mxu0 0
      %465 = vmatmul.mubr.bf16.gmra.mrb[0].mxu0 %v373
      %v466 = vpop.f32.mrb[0].mxu0
      %v467 = vadd.f32 %v362, %v466
      %v468 = vpop.f32.mrb[0].mxu0
      %v469 = vpop.f32.mrb[0].mxu0
      %v470 = vadd.f32 %v362, %v469
      %v471 = vpop.f32.mrb[0].mxu0
      %472 = vdwg.mxu0
      %v473 = vmax.f32 %v459, 0.0
      %v474 = vmax.f32 %v462, 0.0
      %v475 = vmax.f32 %v467, 0.0
      %v476 = vmax.f32 %v470, 0.0
      %v477 = vpack.c.bf16 %v474, %v473
      %v478 = vpack.c.bf16 %v476, %v475
      %v479 = vld [vmem:[%s3] sm:$0xf]
      %v480 = vld [vmem:[%s3 + $0x4] sm:$0xf]
      %v481 = vld [vmem:[%s3 + $0x8] sm:$0xf]
      %v482 = vld [vmem:[%s3 + $0xc] sm:$0xf]
      %v483 = vld [vmem:[%s3 + $0x10] sm:$0xf]
      %v484 = vld [vmem:[%s3 + $0x14] sm:$0xf]
      %v485 = vld [vmem:[%s3 + $0x18] sm:$0xf]
      %v486 = vld [vmem:[%s3 + $0x1c] sm:$0xf]
      %v487 = vld [vmem:[%s3 + $0x20] sm:$0xf]
      %v488 = vld [vmem:[%s3 + $0x24] sm:$0xf]
      %v489 = vld [vmem:[%s3 + $0x28] sm:$0xf]
      %v490 = vld [vmem:[%s3 + $0x2c] sm:$0xf]
      %v491 = vld [vmem:[%s3 + $0x30] sm:$0xf]
      %v492 = vld [vmem:[%s3 + $0x34] sm:$0xf]
      %v493 = vld [vmem:[%s3 + $0x38] sm:$0xf]
      %v494 = vld [vmem:[%s3 + $0x3c] sm:$0xf]
      %v495 = vld [vmem:[%s4] sm:$0x1]
      %v497 = vlaneseq
      %v498 = vshrl.u32 %v497, 7
      %v499 = vsub.s32 0, %v498
      %v500 = vrot.slane %v495, %v499
      %v518 = vunpack.c.l.b16 %v479
      %v519 = vunpack.c.l.b16 %v480
      %v520 = vunpack.c.l.b16 %v481
      %v521 = vunpack.c.l.b16 %v482
      %v522 = vunpack.c.l.b16 %v483
      %v523 = vunpack.c.l.b16 %v484
      %v524 = vunpack.c.l.b16 %v485
      %v525 = vunpack.c.l.b16 %v486
      %v526 = vunpack.c.l.b16 %v487
      %v527 = vunpack.c.l.b16 %v488
      %v528 = vunpack.c.l.b16 %v489
      %v529 = vunpack.c.l.b16 %v490
      %v530 = vunpack.c.l.b16 %v491
      %v531 = vunpack.c.l.b16 %v492
      %v532 = vunpack.c.l.b16 %v493
      %v533 = vunpack.c.l.b16 %v494
      %v534 = vpack.c.b16 %v519, %v518
      %v535 = vpack.c.b16 %v521, %v520
      %v536 = vpack.c.b16 %v523, %v522
      %v537 = vpack.c.b16 %v525, %v524
      %v538 = vpack.c.b16 %v527, %v526
      %v539 = vpack.c.b16 %v529, %v528
      %v540 = vpack.c.b16 %v531, %v530
      %v541 = vpack.c.b16 %v533, %v532
      %550 = vmatprep.subr.bf16.mxu0 0
      %551 = vmatpush1.bf16.msra.mxu0 %v534
      %552 = vmatprep.subr.bf16.mxu0 0
      %553 = vmatpush1.bf16.msra.mxu0 %v535
      %554 = vmatprep.subr.bf16.mxu0 0
      %555 = vmatpush1.bf16.msra.mxu0 %v536
      %556 = vmatprep.subr.bf16.mxu0 0
      %557 = vmatpush1.bf16.msra.mxu0 %v537
      %558 = vmatprep.subr.bf16.mxu0 0
      %559 = vmatpush1.bf16.msra.mxu0 %v538
      %560 = vmatprep.subr.bf16.mxu0 0
      %561 = vmatpush1.bf16.msra.mxu0 %v539
      %562 = vmatprep.subr.bf16.mxu0 0
      %563 = vmatpush1.bf16.msra.mxu0 %v540
      %564 = vmatprep.subr.bf16.mxu0 0
      %565 = vmatpush1.bf16.msra.mxu0 %v541
      %566 = vmatprep.subr.bf16.mxu0 0
      %567 = vmatpush1.bf16.msra.mxu0 0
      %568 = vmatprep.subr.bf16.mxu0 0
      %569 = vmatpush1.bf16.msra.mxu0 0
      %570 = vmatprep.subr.bf16.mxu0 0
      %571 = vmatpush1.bf16.msra.mxu0 0
      %572 = vmatprep.subr.bf16.mxu0 0
      %573 = vmatpush1.bf16.msra.mxu0 0
      %574 = vmatprep.subr.bf16.mxu0 0
      %575 = vmatpush1.bf16.msra.mxu0 0
      %576 = vmatprep.subr.bf16.mxu0 0
      %577 = vmatpush1.bf16.msra.mxu0 0
      %578 = vmatprep.subr.bf16.mxu0 0
      %579 = vmatpush1.bf16.msra.mxu0 0
      %580 = vmatprep.subr.bf16.mxu0 0
      %581 = vmatpush1.bf16.msra.mxu0 0
      %582 = vmatprep.mubr.bf16.mxu0 0
      %583 = vmatmul.mubr.bf16.gmra.mrb[0].mxu0 %v477
      %v584 = vpop.f32.mrb[0].mxu0
      %v585 = vadd.f32 %v500, %v584
      %v586 = vpop.f32.mrb[0].mxu0
      %v587 = vpop.f32.mrb[0].mxu0
      %v588 = vadd.f32 %v500, %v587
      %v589 = vpop.f32.mrb[0].mxu0
      %590 = vmatprep.mubr.bf16.mxu0 0
      %591 = vmatmul.mubr.bf16.gmra.mrb[0].mxu0 %v478
      %v592 = vpop.f32.mrb[0].mxu0
      %v593 = vadd.f32 %v500, %v592
      %v594 = vpop.f32.mrb[0].mxu0
      %v595 = vpop.f32.mrb[0].mxu0
      %v596 = vadd.f32 %v500, %v595
      %v597 = vpop.f32.mrb[0].mxu0
      %598 = vdwg.mxu0
      %v599 = vmax.f32 %v585, 0.0
      %v600 = vmax.f32 %v588, 0.0
      %v601 = vmax.f32 %v593, 0.0
      %v602 = vmax.f32 %v596, 0.0
      %v603 = vpack.c.bf16 %v600, %v599
      %v604 = vpack.c.bf16 %v602, %v601
      %v605 = vld [vmem:[%s5] sm:$0xf]
      %v606 = vld [vmem:[%s5 + $0x4] sm:$0xf]
      %v607 = vld [vmem:[%s5 + $0x8] sm:$0xf]
      %v608 = vld [vmem:[%s5 + $0xc] sm:$0xf]
      %v609 = vld [vmem:[%s5 + $0x10] sm:$0xf]
      %v610 = vld [vmem:[%s5 + $0x14] sm:$0xf]
      %v611 = vld [vmem:[%s5 + $0x18] sm:$0xf]
      %v612 = vld [vmem:[%s5 + $0x1c] sm:$0xf]
      %v613 = vld [vmem:[%s5 + $0x20] sm:$0xf]
      %v614 = vld [vmem:[%s5 + $0x24] sm:$0xf]
      %v615 = vld [vmem:[%s5 + $0x28] sm:$0xf]
      %v616 = vld [vmem:[%s5 + $0x2c] sm:$0xf]
      %v617 = vld [vmem:[%s5 + $0x30] sm:$0xf]
      %v618 = vld [vmem:[%s5 + $0x34] sm:$0xf]
      %v619 = vld [vmem:[%s5 + $0x38] sm:$0xf]
      %v620 = vld [vmem:[%s5 + $0x3c] sm:$0xf]
      %v621 = vld [vmem:[%s6] sm:$0x1]
      %v623 = vlaneseq
      %v624 = vshrl.u32 %v623, 7
      %v625 = vsub.s32 0, %v624
      %v626 = vrot.slane %v621, %v625
      %v644 = vunpack.c.l.b16 %v605
      %v645 = vunpack.c.l.b16 %v606
      %v646 = vunpack.c.l.b16 %v607
      %v647 = vunpack.c.l.b16 %v608
      %v648 = vunpack.c.l.b16 %v609
      %v649 = vunpack.c.l.b16 %v610
      %v650 = vunpack.c.l.b16 %v611
      %v651 = vunpack.c.l.b16 %v612
      %v652 = vunpack.c.l.b16 %v613
      %v653 = vunpack.c.l.b16 %v614
      %v654 = vunpack.c.l.b16 %v615
      %v655 = vunpack.c.l.b16 %v616
      %v656 = vunpack.c.l.b16 %v617
      %v657 = vunpack.c.l.b16 %v618
      %v658 = vunpack.c.l.b16 %v619
      %v659 = vunpack.c.l.b16 %v620
      %v660 = vpack.c.b16 %v645, %v644
      %v661 = vpack.c.b16 %v647, %v646
      %v662 = vpack.c.b16 %v649, %v648
      %v663 = vpack.c.b16 %v651, %v650
      %v664 = vpack.c.b16 %v653, %v652
      %v665 = vpack.c.b16 %v655, %v654
      %v666 = vpack.c.b16 %v657, %v656
      %v667 = vpack.c.b16 %v659, %v658
      %676 = vmatprep.subr.bf16.mxu0 0
      %677 = vmatpush1.bf16.msra.mxu0 %v660
      %678 = vmatprep.subr.bf16.mxu0 0
      %679 = vmatpush1.bf16.msra.mxu0 %v661
      %680 = vmatprep.subr.bf16.mxu0 0
      %681 = vmatpush1.bf16.msra.mxu0 %v662
      %682 = vmatprep.subr.bf16.mxu0 0
      %683 = vmatpush1.bf16.msra.mxu0 %v663
      %684 = vmatprep.subr.bf16.mxu0 0
      %685 = vmatpush1.bf16.msra.mxu0 %v664
      %686 = vmatprep.subr.bf16.mxu0 0
      %687 = vmatpush1.bf16.msra.mxu0 %v665
      %688 = vmatprep.subr.bf16.mxu0 0
      %689 = vmatpush1.bf16.msra.mxu0 %v666
      %690 = vmatprep.subr.bf16.mxu0 0
      %691 = vmatpush1.bf16.msra.mxu0 %v667
      %692 = vmatprep.subr.bf16.mxu0 0
      %693 = vmatpush1.bf16.msra.mxu0 0
      %694 = vmatprep.subr.bf16.mxu0 0
      %695 = vmatpush1.bf16.msra.mxu0 0
      %696 = vmatprep.subr.bf16.mxu0 0
      %697 = vmatpush1.bf16.msra.mxu0 0
      %698 = vmatprep.subr.bf16.mxu0 0
      %699 = vmatpush1.bf16.msra.mxu0 0
      %700 = vmatprep.subr.bf16.mxu0 0
      %701 = vmatpush1.bf16.msra.mxu0 0
      %702 = vmatprep.subr.bf16.mxu0 0
      %703 = vmatpush1.bf16.msra.mxu0 0
      %704 = vmatprep.subr.bf16.mxu0 0
      %705 = vmatpush1.bf16.msra.mxu0 0
      %706 = vmatprep.subr.bf16.mxu0 0
      %707 = vmatpush1.bf16.msra.mxu0 0
      %708 = vmatprep.mubr.bf16.mxu0 0
      %709 = vmatmul.mubr.bf16.gmra.mrb[0].mxu0 %v603
      %v710 = vpop.f32.mrb[0].mxu0
      %v711 = vadd.f32 %v626, %v710
      %v712 = vpop.f32.mrb[0].mxu0
      %v713 = vpop.f32.mrb[0].mxu0
      %v714 = vadd.f32 %v626, %v713
      %v715 = vpop.f32.mrb[0].mxu0
      %716 = vmatprep.mubr.bf16.mxu0 0
      %717 = vmatmul.mubr.bf16.gmra.mrb[0].mxu0 %v604
      %v718 = vpop.f32.mrb[0].mxu0
      %v719 = vadd.f32 %v626, %v718
      %v720 = vpop.f32.mrb[0].mxu0
      %v721 = vpop.f32.mrb[0].mxu0
      %v722 = vadd.f32 %v626, %v721
      %v723 = vpop.f32.mrb[0].mxu0
      %724 = vdwg.mxu0
      %v725 = vmax.f32 %v711, 0.0
      %v726 = vmax.f32 %v714, 0.0
      %v727 = vmax.f32 %v719, 0.0
      %v728 = vmax.f32 %v722, 0.0
      %v729 = vld [vmem:[%s7] sm:$0xf]
      %v730 = vld [vmem:[%s7 + $0x4] sm:$0xf]
      %v731 = vld [vmem:[%s7 + $0x8] sm:$0xf]
      %v732 = vld [vmem:[%s7 + $0xc] sm:$0xf]
      %v733 = vld [vmem:[%s7 + $0x10] sm:$0xf]
      %v734 = vld [vmem:[%s7 + $0x14] sm:$0xf]
      %v735 = vld [vmem:[%s7 + $0x18] sm:$0xf]
      %v736 = vld [vmem:[%s7 + $0x1c] sm:$0xf]
      %v737 = vld [vmem:[%s7 + $0x20] sm:$0xf]
      %v738 = vld [vmem:[%s7 + $0x24] sm:$0xf]
      %v739 = vld [vmem:[%s7 + $0x28] sm:$0xf]
      %v740 = vld [vmem:[%s7 + $0x2c] sm:$0xf]
      %v741 = vld [vmem:[%s7 + $0x30] sm:$0xf]
      %v742 = vld [vmem:[%s7 + $0x34] sm:$0xf]
      %v743 = vld [vmem:[%s7 + $0x38] sm:$0xf]
      %v744 = vld [vmem:[%s7 + $0x3c] sm:$0xf]
      %v745 = vld [vmem:[%s8] sm:$0x1]
      %v747 = vlaneseq
      %v748 = vshrl.u32 %v747, 7
      %v749 = vsub.s32 0, %v748
      %v750 = vrot.slane %v745, %v749
      %v768 = vunpack.c.l.b16 %v729
      %v769 = vunpack.c.l.b16 %v730
      %v770 = vunpack.c.l.b16 %v731
      %v771 = vunpack.c.l.b16 %v732
      %v772 = vunpack.c.l.b16 %v733
      %v773 = vunpack.c.l.b16 %v734
      %v774 = vunpack.c.l.b16 %v735
      %v775 = vunpack.c.l.b16 %v736
      %v776 = vunpack.c.l.b16 %v737
      %v777 = vunpack.c.l.b16 %v738
      %v778 = vunpack.c.l.b16 %v739
      %v779 = vunpack.c.l.b16 %v740
      %v780 = vunpack.c.l.b16 %v741
      %v781 = vunpack.c.l.b16 %v742
      %v782 = vunpack.c.l.b16 %v743
      %v783 = vunpack.c.l.b16 %v744
      %v784 = vpack.c.b16 %v769, %v768
      %v785 = vpack.c.b16 %v771, %v770
      %v786 = vpack.c.b16 %v773, %v772
      %v787 = vpack.c.b16 %v775, %v774
      %v788 = vpack.c.b16 %v777, %v776
      %v789 = vpack.c.b16 %v779, %v778
      %v790 = vpack.c.b16 %v781, %v780
      %v791 = vpack.c.b16 %v783, %v782
      %800 = vmatprep.subr.bf16.mxu0 0
      %801 = vmatpush1.bf16.msra.mxu0 %v784
      %802 = vmatprep.subr.bf16.mxu0 0
      %803 = vmatpush1.bf16.msra.mxu0 %v785
      %804 = vmatprep.subr.bf16.mxu0 0
      %805 = vmatpush1.bf16.msra.mxu0 %v786
      %806 = vmatprep.subr.bf16.mxu0 0
      %807 = vmatpush1.bf16.msra.mxu0 %v787
      %808 = vmatprep.subr.bf16.mxu0 0
      %809 = vmatpush1.bf16.msra.mxu0 %v788
      %810 = vmatprep.subr.bf16.mxu0 0
      %811 = vmatpush1.bf16.msra.mxu0 %v789
      %812 = vmatprep.subr.bf16.mxu0 0
      %813 = vmatpush1.bf16.msra.mxu0 %v790
      %814 = vmatprep.subr.bf16.mxu0 0
      %815 = vmatpush1.bf16.msra.mxu0 %v791
      %816 = vmatprep.subr.bf16.mxu0 0
      %817 = vmatpush1.bf16.msra.mxu0 0
      %818 = vmatprep.subr.bf16.mxu0 0
      %819 = vmatpush1.bf16.msra.mxu0 0
      %820 = vmatprep.subr.bf16.mxu0 0
      %821 = vmatpush1.bf16.msra.mxu0 0
      %822 = vmatprep.subr.bf16.mxu0 0
      %823 = vmatpush1.bf16.msra.mxu0 0
      %824 = vmatprep.subr.bf16.mxu0 0
      %825 = vmatpush1.bf16.msra.mxu0 0
      %826 = vmatprep.subr.bf16.mxu0 0
      %827 = vmatpush1.bf16.msra.mxu0 0
      %828 = vmatprep.subr.bf16.mxu0 0
      %829 = vmatpush1.bf16.msra.mxu0 0
      %830 = vmatprep.subr.bf16.mxu0 0
      %831 = vmatpush1.bf16.msra.mxu0 0
      %832 = vmatprep.mubr.bf16.mxu0 0
      %833 = vmatmul.mubr.bf16.gmra.mrb[0].mxu0 %v372
      %v834 = vpop.f32.mrb[0].mxu0
      %v835 = vadd.f32 %v750, %v834
      %v836 = vpop.f32.mrb[0].mxu0
      %v837 = vpop.f32.mrb[0].mxu0
      %v838 = vadd.f32 %v750, %v837
      %v839 = vpop.f32.mrb[0].mxu0
      %840 = vmatprep.mubr.bf16.mxu0 0
      %841 = vmatmul.mubr.bf16.gmra.mrb[0].mxu0 %v373
      %v842 = vpop.f32.mrb[0].mxu0
      %v843 = vadd.f32 %v750, %v842
      %v844 = vpop.f32.mrb[0].mxu0
      %v845 = vpop.f32.mrb[0].mxu0
      %v846 = vadd.f32 %v750, %v845
      %v847 = vpop.f32.mrb[0].mxu0
      %848 = vdwg.mxu0
      %v849 = vadd.f32 %v725, %v835
      %v850 = vadd.f32 %v726, %v838
      %v851 = vadd.f32 %v727, %v843
      %v852 = vadd.f32 %v728, %v846
      %853 = vst [vmem:[%s334] sm:$0xff] %v849
      %854 = vst [vmem:[%s334 + $0x8] sm:$0xff] %v850
      %855 = vst [vmem:[%s334 + $0x10] sm:$0xff] %v851
      %856 = vst [vmem:[%s334 + $0x18] sm:$0xff] %v852
      %s857 = smul.u32 4, %s20
      %p858 = scmp.lt.s32.totalorder %s857, 7
      %s859 = scalar_select %p858, %s857, 7
      %s860 = smul.addr %s859, 8
      %s861 = scalar_lea.vmem %s9, %s860
      // Predicated region
      $region57: #{ff_forward.1} parent=55 // pred_check
        %p862 = pneg %p232
      $region58: #{ff_forward.1} parent=55 // pred_check_branch
        %864 = sbr.rel (%p862) target = $region60
      $region59: #{ff_forward.1} parent=55 // pred_region
        %s865 = smul.u32 4, %s20
      $region60: #{ff_forward.1} parent=55 // pred_fallthru
        _
    $region56: #{ff_forward.1} parent=5 // pred_fallthru
      _
    %p866 = scmp.le.s32.totalorder 2, %s15
    // Predicated region
    $region61: #{ff_forward.1} parent=5 // pred_check
      %p867 = pneg %p866
    $region62: #{ff_forward.1} parent=5 // pred_check_branch
      %869 = sbr.rel (%p867) target = $region64
    $region63: #{ff_forward.1} parent=5 // pred_region
      %s870 = ssub.s32 %s15, 2
      // Predicated region
      $region65: #{ff_forward.1} parent=63 // pred_check
        %p871 = pneg %p238
      $region66: #{ff_forward.1} parent=63 // pred_check_branch
        %873 = sbr.rel (%p871) target = $region68
      $region67: #{ff_forward.1} parent=63 // pred_region
        %s874 = smul.u32 4, %s21
        %p875 = scmp.lt.s32.totalorder %s874, 7
        %s876 = scalar_select %p875, %s874, 7
        %s877 = smul.addr %s876, 8
        %s878 = scalar_lea.vmem %s9, %s877
      $region68: #{ff_forward.1} parent=63 // pred_fallthru
        _
    $region64: #{ff_forward.1} parent=5 // pred_fallthru
      _
  $region6: #{ff_forward.1} parent=0 // loop_footer
    %s19 = sadd.s32 1, %s15
  $region7: #{ff_forward.1} parent=0 // loop_footer_branch
    %14 = sbr.rel target = $region3
  $region8: #{ff_forward.1} parent=0 // loop_exit
    _

// kernel: ff_forward.1
$region0: #{ff_forward.1}
  #allocation0 [shape = 'u32[]', space=smem, size = 0x4, offset = 0x4, fixed_abs, tag = 'smem constant byte address 0x4 - core index']
  #allocation1 [shape = 'u32[144,128]{1,0:T(1,128)}', space=vmem, size = 0x12000, scoped, tag = 'internal scratch']
  %s0 = inlined_call_operand.vmem [shape: bf16[64,128], index: 0, kind: input, shape index: {}]
  %s1 = inlined_call_operand.vmem [shape: bf16[128,128], index: 1, kind: input, shape index: {}]
  %s2 = inlined_call_operand.vmem [shape: f32[1,128], index: 2, kind: input, shape index: {}]
  %s3 = inlined_call_operand.vmem [shape: bf16[128,128], index: 3, kind: input, shape index: {}]
  %s4 = inlined_call_operand.vmem [shape: f32[1,128], index: 4, kind: input, shape index: {}]
  %s5 = inlined_call_operand.vmem [shape: bf16[128,128], index: 5, kind: input, shape index: {}]
  %s6 = inlined_call_operand.vmem [shape: f32[1,128], index: 6, kind: input, shape index: {}]
  %s7 = inlined_call_operand.vmem [shape: bf16[128,128], index: 7, kind: input, shape index: {}]
  %s8 = inlined_call_operand.vmem [shape: f32[1,128], index: 8, kind: input, shape index: {}]
  %s9 = inlined_call_operand.vmem [shape: f32[64,128], index: 9, kind: output, shape index: {}]
  %s10 = sld [smem:[#allocation0]]
  $region69: #{ff_forward.1} parent=0
    _
  %s12 = ssub.s32 1, %s10
  %s13 = scalar_select 0, %s12, %s10
  loop: start=0, step=1, limit=4
  $region2: #{ff_forward.1} parent=0 // loop_pre_header
    _
  $region3: #{ff_forward.1} parent=0 // loop_header
    %s15 = sphi 0, %s19
    %p16 = scmp.ge.s32.totalorder %s15, 4
    %s25 = sphi 0, %s27
    %s28 = sphi 0, %s25
    %s29 = sphi 0, %s28
    %s45 = sphi 0, %s29
    %s49 = sphi 0, %s49
    %s51 = sphi 0, %s49
    %s52 = sphi 0, %s51
    %s66 = sphi 0, %s52
    %s70 = sphi 0, %s70
    %s72 = sphi 0, %s70
    %s73 = sphi 0, %s72
    %s87 = sphi 0, %s73
    %s91 = sphi 0, %s91
    %s93 = sphi 0, %s91
    %s94 = sphi 0, %s93
    %s108 = sphi 0, %s94
    %s112 = sphi 0, %s112
    %s114 = sphi 0, %s112
    %s115 = sphi 0, %s114
    %s129 = sphi 0, %s115
    %s133 = sphi 0, %s133
    %s135 = sphi 0, %s133
    %s136 = sphi 0, %s135
    %s150 = sphi 0, %s136
    %s154 = sphi 0, %s154
    %s156 = sphi 0, %s154
    %s157 = sphi 0, %s156
    %s171 = sphi 0, %s157
    %s175 = sphi 0, %s175
    %s177 = sphi 0, %s175
    %s178 = sphi 0, %s177
    %s192 = sphi 0, %s178
    %s196 = sphi 0, %s196
    %s198 = sphi 0, %s196
    %s199 = sphi 0, %s198
    %s213 = sphi 0, %s199
    %s219 = sphi 0, %s221
    %s222 = sphi 0, %s219
    %s223 = sphi 0, %s222
    %s239 = sphi 0, %s223
  $region4: #{ff_forward.1} parent=0 // loop_header_branch
    %18 = sbr.rel (%p16) target = $region8
  $region5: #{ff_forward.1} parent=0 // loop_body
    %s20 = ssub.s32 %s15, 1
    %s21 = ssub.s32 %s15, 2
    %s22 = sadd.s32 %s15, 1
    %s23 = ssub.s32 %s15, %s22
    %p24 = scmp.eq.s32.totalorder %s23, 0
    %s26 = sadd.s32 %s25, 1
    %s27 = scalar_select %p24, %s25, %s26
    %p30 = pneg %p24
    %p31 = scmp.eq.s32.totalorder %s15, 1
    %p32 = por %p30, %p31
    %p33 = scmp.ne.s32.totalorder %s25, %s28
    %p34 = scmp.eq.s32.totalorder %s15, 0
    %p35 = por %p33, %p34
    %p36 = scmp.ne.s32.totalorder %s25, %s28
    %p37 = scmp.eq.s32.totalorder %s20, 1
    %p38 = por %p36, %p37
    %p39 = scmp.ne.s32.totalorder %s28, %s29
    %p40 = scmp.eq.s32.totalorder %s20, 0
    %p41 = por %p39, %p40
    %p42 = scmp.ne.s32.totalorder %s28, %s29
    %p43 = scmp.eq.s32.totalorder %s21, 1
    %p44 = por %p42, %p43
    %p46 = scmp.ne.s32.totalorder %s29, %s45
    %p47 = scmp.eq.s32.totalorder %s21, 0
    %p48 = por %p46, %p47
    %s50 = sadd.s32 %s49, 1
    %p53 = scmp.eq.s32.totalorder %s15, 1
    %p54 = scmp.ne.s32.totalorder %s49, %s51
    %p55 = scmp.eq.s32.totalorder %s15, 0
    %p56 = por %p54, %p55
    %p57 = scmp.ne.s32.totalorder %s49, %s51
    %p58 = scmp.eq.s32.totalorder %s20, 1
    %p59 = por %p57, %p58
    %p60 = scmp.ne.s32.totalorder %s51, %s52
    %p61 = scmp.eq.s32.totalorder %s20, 0
    %p62 = por %p60, %p61
    %p63 = scmp.ne.s32.totalorder %s51, %s52
    %p64 = scmp.eq.s32.totalorder %s21, 1
    %p65 = por %p63, %p64
    %p67 = scmp.ne.s32.totalorder %s52, %s66
    %p68 = scmp.eq.s32.totalorder %s21, 0
    %p69 = por %p67, %p68
    %s71 = sadd.s32 %s70, 1
    %p74 = scmp.eq.s32.totalorder %s15, 1
    %p75 = scmp.ne.s32.totalorder %s70, %s72
    %p76 = scmp.eq.s32.totalorder %s15, 0
    %p77 = por %p75, %p76
    %p78 = scmp.ne.s32.totalorder %s70, %s72
    %p79 = scmp.eq.s32.totalorder %s20, 1
    %p80 = por %p78, %p79
    %p81 = scmp.ne.s32.totalorder %s72, %s73
    %p82 = scmp.eq.s32.totalorder %s20, 0
    %p83 = por %p81, %p82
    %p84 = scmp.ne.s32.totalorder %s72, %s73
    %p85 = scmp.eq.s32.totalorder %s21, 1
    %p86 = por %p84, %p85
    %p88 = scmp.ne.s32.totalorder %s73, %s87
    %p89 = scmp.eq.s32.totalorder %s21, 0
    %p90 = por %p88, %p89
    %s92 = sadd.s32 %s91, 1
    %p95 = scmp.eq.s32.totalorder %s15, 1
    %p96 = scmp.ne.s32.totalorder %s91, %s93
    %p97 = scmp.eq.s32.totalorder %s15, 0
    %p98 = por %p96, %p97
    %p99 = scmp.ne.s32.totalorder %s91, %s93
    %p100 = scmp.eq.s32.totalorder %s20, 1
    %p101 = por %p99, %p100
    %p102 = scmp.ne.s32.totalorder %s93, %s94
    %p103 = scmp.eq.s32.totalorder %s20, 0
    %p104 = por %p102, %p103
    %p105 = scmp.ne.s32.totalorder %s93, %s94
    %p106 = scmp.eq.s32.totalorder %s21, 1
    %p107 = por %p105, %p106
    %p109 = scmp.ne.s32.totalorder %s94, %s108
    %p110 = scmp.eq.s32.totalorder %s21, 0
    %p111 = por %p109, %p110
    %s113 = sadd.s32 %s112, 1
    %p116 = scmp.eq.s32.totalorder %s15, 1
    %p117 = scmp.ne.s32.totalorder %s112, %s114
    %p118 = scmp.eq.s32.totalorder %s15, 0
    %p119 = por %p117, %p118
    %p120 = scmp.ne.s32.totalorder %s112, %s114
    %p121 = scmp.eq.s32.totalorder %s20, 1
    %p122 = por %p120, %p121
    %p123 = scmp.ne.s32.totalorder %s114, %s115
    %p124 = scmp.eq.s32.totalorder %s20, 0
    %p125 = por %p123, %p124
    %p126 = scmp.ne.s32.totalorder %s114, %s115
    %p127 = scmp.eq.s32.totalorder %s21, 1
    %p128 = por %p126, %p127
    %p130 = scmp.ne.s32.totalorder %s115, %s129
    %p131 = scmp.eq.s32.totalorder %s21, 0
    %p132 = por %p130, %p131
    %s134 = sadd.s32 %s133, 1
    %p137 = scmp.eq.s32.totalorder %s15, 1
    %p138 = scmp.ne.s32.totalorder %s133, %s135
    %p139 = scmp.eq.s32.totalorder %s15, 0
    %p140 = por %p138, %p139
    %p141 = scmp.ne.s32.totalorder %s133, %s135
    %p142 = scmp.eq.s32.totalorder %s20, 1
    %p143 = por %p141, %p142
    %p144 = scmp.ne.s32.totalorder %s135, %s136
    %p145 = scmp.eq.s32.totalorder %s20, 0
    %p146 = por %p144, %p145
    %p147 = scmp.ne.s32.totalorder %s135, %s136
    %p148 = scmp.eq.s32.totalorder %s21, 1
    %p149 = por %p147, %p148
    %p151 = scmp.ne.s32.totalorder %s136, %s150
    %p152 = scmp.eq.s32.totalorder %s21, 0
    %p153 = por %p151, %p152
    %s155 = sadd.s32 %s154, 1
    %p158 = scmp.eq.s32.totalorder %s15, 1
    %p159 = scmp.ne.s32.totalorder %s154, %s156
    %p160 = scmp.eq.s32.totalorder %s15, 0
    %p161 = por %p159, %p160
    %p162 = scmp.ne.s32.totalorder %s154, %s156
    %p163 = scmp.eq.s32.totalorder %s20, 1
    %p164 = por %p162, %p163
    %p165 = scmp.ne.s32.totalorder %s156, %s157
    %p166 = scmp.eq.s32.totalorder %s20, 0
    %p167 = por %p165, %p166
    %p168 = scmp.ne.s32.totalorder %s156, %s157
    %p169 = scmp.eq.s32.totalorder %s21, 1
    %p170 = por %p168, %p169
    %p172 = scmp.ne.s32.totalorder %s157, %s171
    %p173 = scmp.eq.s32.totalorder %s21, 0
    %p174 = por %p172, %p173
    %s176 = sadd.s32 %s175, 1
    %p179 = scmp.eq.s32.totalorder %s15, 1
    %p180 = scmp.ne.s32.totalorder %s175, %s177
    %p181 = scmp.eq.s32.totalorder %s15, 0
    %p182 = por %p180, %p181
    %p183 = scmp.ne.s32.totalorder %s175, %s177
    %p184 = scmp.eq.s32.totalorder %s20, 1
    %p185 = por %p183, %p184
    %p186 = scmp.ne.s32.totalorder %s177, %s178
    %p187 = scmp.eq.s32.totalorder %s20, 0
    %p188 = por %p186, %p187
    %p189 = scmp.ne.s32.totalorder %s177, %s178
    %p190 = scmp.eq.s32.totalorder %s21, 1
    %p191 = por %p189, %p190
    %p193 = scmp.ne.s32.totalorder %s178, %s192
    %p194 = scmp.eq.s32.totalorder %s21, 0
    %p195 = por %p193, %p194
    %s197 = sadd.s32 %s196, 1
    %p200 = scmp.eq.s32.totalorder %s15, 1
    %p201 = scmp.ne.s32.totalorder %s196, %s198
    %p202 = scmp.eq.s32.totalorder %s15, 0
    %p203 = por %p201, %p202
    %p204 = scmp.ne.s32.totalorder %s196, %s198
    %p205 = scmp.eq.s32.totalorder %s20, 1
    %p206 = por %p204, %p205
    %p207 = scmp.ne.s32.totalorder %s198, %s199
    %p208 = scmp.eq.s32.totalorder %s20, 0
    %p209 = por %p207, %p208
    %p210 = scmp.ne.s32.totalorder %s198, %s199
    %p211 = scmp.eq.s32.totalorder %s21, 1
    %p212 = por %p210, %p211
    %p214 = scmp.ne.s32.totalorder %s199, %s213
    %p215 = scmp.eq.s32.totalorder %s21, 0
    %p216 = por %p214, %p215
    %s217 = ssub.s32 %s15, %s22
    %p218 = scmp.eq.s32.totalorder %s217, 0
    %s220 = sadd.s32 %s219, 1
    %s221 = scalar_select %p218, %s219, %s220
    %p224 = pneg %p218
    %p225 = scmp.eq.s32.totalorder %s15, 1
    %p226 = por %p224, %p225
    %p227 = scmp.ne.s32.totalorder %s219, %s222
    %p228 = scmp.eq.s32.totalorder %s15, 0
    %p229 = por %p227, %p228
    %p230 = scmp.ne.s32.totalorder %s219, %s222
    %p231 = scmp.eq.s32.totalorder %s20, 1
    %p232 = por %p230, %p231
    %p233 = scmp.ne.s32.totalorder %s222, %s223
    %p234 = scmp.eq.s32.totalorder %s20, 0
    %p235 = por %p233, %p234
    %p236 = scmp.ne.s32.totalorder %s222, %s223
    %p237 = scmp.eq.s32.totalorder %s21, 1
    %p238 = por %p236, %p237
    %p240 = scmp.ne.s32.totalorder %s223, %s239
    %p241 = scmp.eq.s32.totalorder %s21, 0
    %p242 = por %p240, %p241
    %p243 = scmp.le.s32.totalorder 1, %s15
    %p244 = scmp.lt.s32.totalorder %s15, 3
    %p245 = pnand %p243, %p244
    %p246 = pneg %p245
    // Predicated region
    $region9: #{ff_forward.1} parent=5 // pred_check
      _
    $region10: #{ff_forward.1} parent=5 // pred_check_branch
      %248 = sbr.rel (%p245) target = $region12
    $region11: #{ff_forward.1} parent=5 // pred_region
      %s249 = ssub.s32 %s15, 1
      // Predicated region
      $region13: #{ff_forward.1} parent=11 // pred_check
        %p250 = pneg %p62
      $region14: #{ff_forward.1} parent=11 // pred_check_branch
        %252 = sbr.rel (%p250) target = $region16
      $region15: #{ff_forward.1} parent=11 // pred_region
        _
      $region16: #{ff_forward.1} parent=11 // pred_fallthru
        _
      // Predicated region
      $region17: #{ff_forward.1} parent=11 // pred_check
        %p253 = pneg %p83
      $region18: #{ff_forward.1} parent=11 // pred_check_branch
        %255 = sbr.rel (%p253) target = $region20
      $region19: #{ff_forward.1} parent=11 // pred_region
        _
      $region20: #{ff_forward.1} parent=11 // pred_fallthru
        _
      // Predicated region
      $region21: #{ff_forward.1} parent=11 // pred_check
        %p256 = pneg %p104
      $region22: #{ff_forward.1} parent=11 // pred_check_branch
        %258 = sbr.rel (%p256) target = $region24
      $region23: #{ff_forward.1} parent=11 // pred_region
        _
      $region24: #{ff_forward.1} parent=11 // pred_fallthru
        _
      // Predicated region
      $region25: #{ff_forward.1} parent=11 // pred_check
        %p259 = pneg %p125
      $region26: #{ff_forward.1} parent=11 // pred_check_branch
        %261 = sbr.rel (%p259) target = $region28
      $region27: #{ff_forward.1} parent=11 // pred_region
        _
      $region28: #{ff_forward.1} parent=11 // pred_fallthru
        _
      // Predicated region
      $region29: #{ff_forward.1} parent=11 // pred_check
        %p262 = pneg %p146
      $region30: #{ff_forward.1} parent=11 // pred_check_branch
        %264 = sbr.rel (%p262) target = $region32
      $region31: #{ff_forward.1} parent=11 // pred_region
        _
      $region32: #{ff_forward.1} parent=11 // pred_fallthru
        _
      // Predicated region
      $region33: #{ff_forward.1} parent=11 // pred_check
        %p265 = pneg %p167
      $region34: #{ff_forward.1} parent=11 // pred_check_branch
        %267 = sbr.rel (%p265) target = $region36
      $region35: #{ff_forward.1} parent=11 // pred_region
        _
      $region36: #{ff_forward.1} parent=11 // pred_fallthru
        _
      // Predicated region
      $region37: #{ff_forward.1} parent=11 // pred_check
        %p268 = pneg %p188
      $region38: #{ff_forward.1} parent=11 // pred_check_branch
        %270 = sbr.rel (%p268) target = $region40
      $region39: #{ff_forward.1} parent=11 // pred_region
        _
      $region40: #{ff_forward.1} parent=11 // pred_fallthru
        _
      // Predicated region
      $region41: #{ff_forward.1} parent=11 // pred_check
        %p271 = pneg %p209
      $region42: #{ff_forward.1} parent=11 // pred_check_branch
        %273 = sbr.rel (%p271) target = $region44
      $region43: #{ff_forward.1} parent=11 // pred_region
        _
      $region44: #{ff_forward.1} parent=11 // pred_fallthru
        _
    $region12: #{ff_forward.1} parent=5 // pred_fallthru
      _
    %p274 = scmp.lt.s32.totalorder %s15, 2
    // Predicated region
    $region45: #{ff_forward.1} parent=5 // pred_check
      %p275 = pneg %p274
    $region46: #{ff_forward.1} parent=5 // pred_check_branch
      %277 = sbr.rel (%p275) target = $region48
    $region47: #{ff_forward.1} parent=5 // pred_region
      // Predicated region
      $region49: #{ff_forward.1} parent=47 // pred_check
        %p278 = pneg %p35
      $region50: #{ff_forward.1} parent=47 // pred_check_branch
        %280 = sbr.rel (%p278) target = $region52
      $region51: #{ff_forward.1} parent=47 // pred_region
        %s281 = smul.u32 4, %s15
        %p282 = scmp.lt.s32.totalorder %s281, 7
        %s283 = scalar_select %p282, %s281, 7
        %s284 = smul.addr %s283, 4
        %s285 = scalar_lea.vmem %s0, %s284
        %s286 = smul.u32 4, %s15
      $region52: #{ff_forward.1} parent=47 // pred_fallthru
        _
    $region48: #{ff_forward.1} parent=5 // pred_fallthru
      _
    %p287 = scmp.le.s32.totalorder 1, %s15
    %p288 = scmp.lt.s32.totalorder %s15, 3
    %p289 = pnand %p287, %p288
    %p290 = pneg %p289
    // Predicated region
    $region53: #{ff_forward.1} parent=5 // pred_check
      _
    $region54: #{ff_forward.1} parent=5 // pred_check_branch
      %292 = sbr.rel (%p289) target = $region56
    $region55: #{ff_forward.1} parent=5 // pred_region
      %s293 = ssub.s32 %s15, 1
      %s294 = smul.u32 4, %s20
      %p295 = scmp.lt.s32.totalorder %s294, 7
      %s296 = scalar_select %p295, %s294, 7
      %s297 = smul.addr %s296, 4
      %s298 = scalar_lea.vmem %s0, %s297
      %p299 = pneg %p41
      %p300 = pneg %p38
      %p301 = pneg %p62
      %p302 = pneg %p59
      %p303 = pneg %p83
      %p304 = pneg %p80
      %p305 = pneg %p104
      %p306 = pneg %p101
      %p307 = pneg %p125
      %p308 = pneg %p122
      %p309 = pneg %p146
      %p310 = pneg %p143
      %p311 = pneg %p167
      %p312 = pneg %p164
      %p313 = pneg %p188
      %p314 = pneg %p185
      %p315 = pneg %p209
      %p316 = pneg %p206
      %p317 = pneg %p235
      %p318 = pneg %p232
      %s319 = smul.u32 4, %s20
      %p320 = scmp.lt.s32.totalorder %s319, 7
      %s321 = scalar_select %p320, %s319, 7
      %s322 = smul.addr %s321, 8
      %s323 = scalar_lea.vmem %s9, %s322
      %s324 = smul.u32 4, %s20
      %p325 = scmp.lt.s32.totalorder %s324, 7
      %s326 = scalar_select %p325, %s324, 7
      %s327 = smul.addr %s326, 4
      %s328 = scalar_lea.vmem %s0, %s327
      %s329 = smul.u32 4, %s20
      %s330 = smul.u32 4, %s20
      %p331 = scmp.lt.s32.totalorder %s330, 7
      %s332 = scalar_select %p331, %s330, 7
      %s333 = smul.addr %s332, 8
      %s334 = scalar_lea.vmem %s9, %s333
      %s335 = smul.u32 4, %s20
      %v337 = vld [vmem:[%s328] sm:$0xf]
      %v338 = vld [vmem:[%s328 + $0x4] sm:$0xf]
      %v339 = vld [vmem:[%s328 + $0x8] sm:$0xf]
      %v340 = vld [vmem:[%s328 + $0xc] sm:$0xf]
      %v341 = vld [vmem:[%s1] sm:$0xf]
      %v342 = vld [vmem:[%s1 + $0x4] sm:$0xf]
      %v343 = vld [vmem:[%s1 + $0x8] sm:$0xf]
      %v344 = vld [vmem:[%s1 + $0xc] sm:$0xf]
      %v345 = vld [vmem:[%s1 + $0x10] sm:$0xf]
      %v346 = vld [vmem:[%s1 + $0x14] sm:$0xf]
      %v347 = vld [vmem:[%s1 + $0x18] sm:$0xf]
      %v348 = vld [vmem:[%s1 + $0x1c] sm:$0xf]
      %v349 = vld [vmem:[%s1 + $0x20] sm:$0xf]
      %v350 = vld [vmem:[%s1 + $0x24] sm:$0xf]
      %v351 = vld [vmem:[%s1 + $0x28] sm:$0xf]
      %v352 = vld [vmem:[%s1 + $0x2c] sm:$0xf]
      %v353 = vld [vmem:[%s1 + $0x30] sm:$0xf]
      %v354 = vld [vmem:[%s1 + $0x34] sm:$0xf]
      %v355 = vld [vmem:[%s1 + $0x38] sm:$0xf]
      %v356 = vld [vmem:[%s1 + $0x3c] sm:$0xf]
      %v357 = vld [vmem:[%s2] sm:$0x1]
      %v359 = vlaneseq
      %v360 = vshrl.u32 %v359, 7
      %v361 = vsub.s32 0, %v360
      %v362 = vrot.slane %v357, %v361
      %v368 = vunpack.c.l.b16 %v337
      %v369 = vunpack.c.l.b16 %v338
      %v370 = vunpack.c.l.b16 %v339
      %v371 = vunpack.c.l.b16 %v340
      %v372 = vpack.c.b16 %v369, %v368
      %v373 = vpack.c.b16 %v371, %v370
      %v392 = vunpack.c.l.b16 %v341
      %v393 = vunpack.c.l.b16 %v342
      %v394 = vunpack.c.l.b16 %v343
      %v395 = vunpack.c.l.b16 %v344
      %v396 = vunpack.c.l.b16 %v345
      %v397 = vunpack.c.l.b16 %v346
      %v398 = vunpack.c.l.b16 %v347
      %v399 = vunpack.c.l.b16 %v348
      %v400 = vunpack.c.l.b16 %v349
      %v401 = vunpack.c.l.b16 %v350
      %v402 = vunpack.c.l.b16 %v351
      %v403 = vunpack.c.l.b16 %v352
      %v404 = vunpack.c.l.b16 %v353
      %v405 = vunpack.c.l.b16 %v354
      %v406 = vunpack.c.l.b16 %v355
      %v407 = vunpack.c.l.b16 %v356
      %v408 = vpack.c.b16 %v393, %v392
      %v409 = vpack.c.b16 %v395, %v394
      %v410 = vpack.c.b16 %v397, %v396
      %v411 = vpack.c.b16 %v399, %v398
      %v412 = vpack.c.b16 %v401, %v400
      %v413 = vpack.c.b16 %v403, %v402
      %v414 = vpack.c.b16 %v405, %v404
      %v415 = vpack.c.b16 %v407, %v406
      %424 = vmatprep.subr.bf16.mxu0 0
      %425 = vmatpush1.bf16.msra.mxu0 %v408
      %426 = vmatprep.subr.bf16.mxu0 0
      %427 = vmatpush1.bf16.msra.mxu0 %v409
      %428 = vmatprep.subr.bf16.mxu0 0
      %429 = vmatpush1.bf16.msra.mxu0 %v410
      %430 = vmatprep.subr.bf16.mxu0 0
      %431 = vmatpush1.bf16.msra.mxu0 %v411
      %432 = vmatprep.subr.bf16.mxu0 0
      %433 = vmatpush1.bf16.msra.mxu0 %v412
      %434 = vmatprep.subr.bf16.mxu0 0
      %435 = vmatpush1.bf16.msra.mxu0 %v413
      %436 = vmatprep.subr.bf16.mxu0 0
      %437 = vmatpush1.bf16.msra.mxu0 %v414
      %438 = vmatprep.subr.bf16.mxu0 0
      %439 = vmatpush1.bf16.msra.mxu0 %v415
      %440 = vmatprep.subr.bf16.mxu0 0
      %441 = vmatpush1.bf16.msra.mxu0 0
      %442 = vmatprep.subr.bf16.mxu0 0
      %443 = vmatpush1.bf16.msra.mxu0 0
      %444 = vmatprep.subr.bf16.mxu0 0
      %445 = vmatpush1.bf16.msra.mxu0 0
      %446 = vmatprep.subr.bf16.mxu0 0
      %447 = vmatpush1.bf16.msra.mxu0 0
      %448 = vmatprep.subr.bf16.mxu0 0
      %449 = vmatpush1.bf16.msra.mxu0 0
      %450 = vmatprep.subr.bf16.mxu0 0
      %451 = vmatpush1.bf16.msra.mxu0 0
      %452 = vmatprep.subr.bf16.mxu0 0
      %453 = vmatpush1.bf16.msra.mxu0 0
      %454 = vmatprep.subr.bf16.mxu0 0
      %455 = vmatpush1.bf16.msra.mxu0 0
      %456 = vmatprep.mubr.bf16.mxu0 0
      %457 = vmatmul.mubr.bf16.gmra.mrb[0].mxu0 %v372
      %v458 = vpop.f32.mrb[0].mxu0
      %v459 = vadd.f32 %v362, %v458
      %v460 = vpop.f32.mrb[0].mxu0
      %v461 = vpop.f32.mrb[0].mxu0
      %v462 = vadd.f32 %v362, %v461
      %v463 = vpop.f32.mrb[0].mxu0
      %464 = vmatprep.mubr.bf16.mxu0 0
      %465 = vmatmul.mubr.bf16.gmra.mrb[0].mxu0 %v373
      %v466 = vpop.f32.mrb[0].mxu0
      %v467 = vadd.f32 %v362, %v466
      %v468 = vpop.f32.mrb[0].mxu0
      %v469 = vpop.f32.mrb[0].mxu0
      %v470 = vadd.f32 %v362, %v469
      %v471 = vpop.f32.mrb[0].mxu0
      %472 = vdwg.mxu0
      %v473 = vmax.f32 %v459, 0.0
      %v474 = vmax.f32 %v462, 0.0
      %v475 = vmax.f32 %v467, 0.0
      %v476 = vmax.f32 %v470, 0.0
      %v477 = vpack.c.bf16 %v474, %v473
      %v478 = vpack.c.bf16 %v476, %v475
      %v479 = vld [vmem:[%s3] sm:$0xf]
      %v480 = vld [vmem:[%s3 + $0x4] sm:$0xf]
      %v481 = vld [vmem:[%s3 + $0x8] sm:$0xf]
      %v482 = vld [vmem:[%s3 + $0xc] sm:$0xf]
      %v483 = vld [vmem:[%s3 + $0x10] sm:$0xf]
      %v484 = vld [vmem:[%s3 + $0x14] sm:$0xf]
      %v485 = vld [vmem:[%s3 + $0x18] sm:$0xf]
      %v486 = vld [vmem:[%s3 + $0x1c] sm:$0xf]
      %v487 = vld [vmem:[%s3 + $0x20] sm:$0xf]
      %v488 = vld [vmem:[%s3 + $0x24] sm:$0xf]
      %v489 = vld [vmem:[%s3 + $0x28] sm:$0xf]
      %v490 = vld [vmem:[%s3 + $0x2c] sm:$0xf]
      %v491 = vld [vmem:[%s3 + $0x30] sm:$0xf]
      %v492 = vld [vmem:[%s3 + $0x34] sm:$0xf]
      %v493 = vld [vmem:[%s3 + $0x38] sm:$0xf]
      %v494 = vld [vmem:[%s3 + $0x3c] sm:$0xf]
      %v495 = vld [vmem:[%s4] sm:$0x1]
      %v497 = vlaneseq
      %v498 = vshrl.u32 %v497, 7
      %v499 = vsub.s32 0, %v498
      %v500 = vrot.slane %v495, %v499
      %v518 = vunpack.c.l.b16 %v479
      %v519 = vunpack.c.l.b16 %v480
      %v520 = vunpack.c.l.b16 %v481
      %v521 = vunpack.c.l.b16 %v482
      %v522 = vunpack.c.l.b16 %v483
      %v523 = vunpack.c.l.b16 %v484
      %v524 = vunpack.c.l.b16 %v485
      %v525 = vunpack.c.l.b16 %v486
      %v526 = vunpack.c.l.b16 %v487
      %v527 = vunpack.c.l.b16 %v488
      %v528 = vunpack.c.l.b16 %v489
      %v529 = vunpack.c.l.b16 %v490
      %v530 = vunpack.c.l.b16 %v491
      %v531 = vunpack.c.l.b16 %v492
      %v532 = vunpack.c.l.b16 %v493
      %v533 = vunpack.c.l.b16 %v494
      %v534 = vpack.c.b16 %v519, %v518
      %v535 = vpack.c.b16 %v521, %v520
      %v536 = vpack.c.b16 %v523, %v522
      %v537 = vpack.c.b16 %v525, %v524
      %v538 = vpack.c.b16 %v527, %v526
      %v539 = vpack.c.b16 %v529, %v528
      %v540 = vpack.c.b16 %v531, %v530
      %v541 = vpack.c.b16 %v533, %v532
      %550 = vmatprep.subr.bf16.mxu0 0
      %551 = vmatpush1.bf16.msra.mxu0 %v534
      %552 = vmatprep.subr.bf16.mxu0 0
      %553 = vmatpush1.bf16.msra.mxu0 %v535
      %554 = vmatprep.subr.bf16.mxu0 0
      %555 = vmatpush1.bf16.msra.mxu0 %v536
      %556 = vmatprep.subr.bf16.mxu0 0
      %557 = vmatpush1.bf16.msra.mxu0 %v537
      %558 = vmatprep.subr.bf16.mxu0 0
      %559 = vmatpush1.bf16.msra.mxu0 %v538
      %560 = vmatprep.subr.bf16.mxu0 0
      %561 = vmatpush1.bf16.msra.mxu0 %v539
      %562 = vmatprep.subr.bf16.mxu0 0
      %563 = vmatpush1.bf16.msra.mxu0 %v540
      %564 = vmatprep.subr.bf16.mxu0 0
      %565 = vmatpush1.bf16.msra.mxu0 %v541
      %566 = vmatprep.subr.bf16.mxu0 0
      %567 = vmatpush1.bf16.msra.mxu0 0
      %568 = vmatprep.subr.bf16.mxu0 0
      %569 = vmatpush1.bf16.msra.mxu0 0
      %570 = vmatprep.subr.bf16.mxu0 0
      %571 = vmatpush1.bf16.msra.mxu0 0
      %572 = vmatprep.subr.bf16.mxu0 0
      %573 = vmatpush1.bf16.msra.mxu0 0
      %574 = vmatprep.subr.bf16.mxu0 0
      %575 = vmatpush1.bf16.msra.mxu0 0
      %576 = vmatprep.subr.bf16.mxu0 0
      %577 = vmatpush1.bf16.msra.mxu0 0
      %578 = vmatprep.subr.bf16.mxu0 0
      %579 = vmatpush1.bf16.msra.mxu0 0
      %580 = vmatprep.subr.bf16.mxu0 0
      %581 = vmatpush1.bf16.msra.mxu0 0
      %582 = vmatprep.mubr.bf16.mxu0 0
      %583 = vmatmul.mubr.bf16.gmra.mrb[0].mxu0 %v477
      %v584 = vpop.f32.mrb[0].mxu0
      %v585 = vadd.f32 %v500, %v584
      %v586 = vpop.f32.mrb[0].mxu0
      %v587 = vpop.f32.mrb[0].mxu0
      %v588 = vadd.f32 %v500, %v587
      %v589 = vpop.f32.mrb[0].mxu0
      %590 = vmatprep.mubr.bf16.mxu0 0
      %591 = vmatmul.mubr.bf16.gmra.mrb[0].mxu0 %v478
      %v592 = vpop.f32.mrb[0].mxu0
      %v593 = vadd.f32 %v500, %v592
      %v594 = vpop.f32.mrb[0].mxu0
      %v595 = vpop.f32.mrb[0].mxu0
      %v596 = vadd.f32 %v500, %v595
      %v597 = vpop.f32.mrb[0].mxu0
      %598 = vdwg.mxu0
      %v599 = vmax.f32 %v585, 0.0
      %v600 = vmax.f32 %v588, 0.0
      %v601 = vmax.f32 %v593, 0.0
      %v602 = vmax.f32 %v596, 0.0
      %v603 = vpack.c.bf16 %v600, %v599
      %v604 = vpack.c.bf16 %v602, %v601
      %v605 = vld [vmem:[%s5] sm:$0xf]
      %v606 = vld [vmem:[%s5 + $0x4] sm:$0xf]
      %v607 = vld [vmem:[%s5 + $0x8] sm:$0xf]
      %v608 = vld [vmem:[%s5 + $0xc] sm:$0xf]
      %v609 = vld [vmem:[%s5 + $0x10] sm:$0xf]
      %v610 = vld [vmem:[%s5 + $0x14] sm:$0xf]
      %v611 = vld [vmem:[%s5 + $0x18] sm:$0xf]
      %v612 = vld [vmem:[%s5 + $0x1c] sm:$0xf]
      %v613 = vld [vmem:[%s5 + $0x20] sm:$0xf]
      %v614 = vld [vmem:[%s5 + $0x24] sm:$0xf]
      %v615 = vld [vmem:[%s5 + $0x28] sm:$0xf]
      %v616 = vld [vmem:[%s5 + $0x2c] sm:$0xf]
      %v617 = vld [vmem:[%s5 + $0x30] sm:$0xf]
      %v618 = vld [vmem:[%s5 + $0x34] sm:$0xf]
      %v619 = vld [vmem:[%s5 + $0x38] sm:$0xf]
      %v620 = vld [vmem:[%s5 + $0x3c] sm:$0xf]
      %v621 = vld [vmem:[%s6] sm:$0x1]
      %v623 = vlaneseq
      %v624 = vshrl.u32 %v623, 7
      %v625 = vsub.s32 0, %v624
      %v626 = vrot.slane %v621, %v625
      %v644 = vunpack.c.l.b16 %v605
      %v645 = vunpack.c.l.b16 %v606
      %v646 = vunpack.c.l.b16 %v607
      %v647 = vunpack.c.l.b16 %v608
      %v648 = vunpack.c.l.b16 %v609
      %v649 = vunpack.c.l.b16 %v610
      %v650 = vunpack.c.l.b16 %v611
      %v651 = vunpack.c.l.b16 %v612
      %v652 = vunpack.c.l.b16 %v613
      %v653 = vunpack.c.l.b16 %v614
      %v654 = vunpack.c.l.b16 %v615
      %v655 = vunpack.c.l.b16 %v616
      %v656 = vunpack.c.l.b16 %v617
      %v657 = vunpack.c.l.b16 %v618
      %v658 = vunpack.c.l.b16 %v619
      %v659 = vunpack.c.l.b16 %v620
      %v660 = vpack.c.b16 %v645, %v644
      %v661 = vpack.c.b16 %v647, %v646
      %v662 = vpack.c.b16 %v649, %v648
      %v663 = vpack.c.b16 %v651, %v650
      %v664 = vpack.c.b16 %v653, %v652
      %v665 = vpack.c.b16 %v655, %v654
      %v666 = vpack.c.b16 %v657, %v656
      %v667 = vpack.c.b16 %v659, %v658
      %676 = vmatprep.subr.bf16.mxu0 0
      %677 = vmatpush1.bf16.msra.mxu0 %v660
      %678 = vmatprep.subr.bf16.mxu0 0
      %679 = vmatpush1.bf16.msra.mxu0 %v661
      %680 = vmatprep.subr.bf16.mxu0 0
      %681 = vmatpush1.bf16.msra.mxu0 %v662
      %682 = vmatprep.subr.bf16.mxu0 0
      %683 = vmatpush1.bf16.msra.mxu0 %v663
      %684 = vmatprep.subr.bf16.mxu0 0
      %685 = vmatpush1.bf16.msra.mxu0 %v664
      %686 = vmatprep.subr.bf16.mxu0 0
      %687 = vmatpush1.bf16.msra.mxu0 %v665
      %688 = vmatprep.subr.bf16.mxu0 0
      %689 = vmatpush1.bf16.msra.mxu0 %v666
      %690 = vmatprep.subr.bf16.mxu0 0
      %691 = vmatpush1.bf16.msra.mxu0 %v667
      %692 = vmatprep.subr.bf16.mxu0 0
      %693 = vmatpush1.bf16.msra.mxu0 0
      %694 = vmatprep.subr.bf16.mxu0 0
      %695 = vmatpush1.bf16.msra.mxu0 0
      %696 = vmatprep.subr.bf16.mxu0 0
      %697 = vmatpush1.bf16.msra.mxu0 0
      %698 = vmatprep.subr.bf16.mxu0 0
      %699 = vmatpush1.bf16.msra.mxu0 0
      %700 = vmatprep.subr.bf16.mxu0 0
      %701 = vmatpush1.bf16.msra.mxu0 0
      %702 = vmatprep.subr.bf16.mxu0 0
      %703 = vmatpush1.bf16.msra.mxu0 0
      %704 = vmatprep.subr.bf16.mxu0 0
      %705 = vmatpush1.bf16.msra.mxu0 0
      %706 = vmatprep.subr.bf16.mxu0 0
      %707 = vmatpush1.bf16.msra.mxu0 0
      %708 = vmatprep.mubr.bf16.mxu0 0
      %709 = vmatmul.mubr.bf16.gmra.mrb[0].mxu0 %v603
      %v710 = vpop.f32.mrb[0].mxu0
      %v711 = vadd.f32 %v626, %v710
      %v712 = vpop.f32.mrb[0].mxu0
      %v713 = vpop.f32.mrb[0].mxu0
      %v714 = vadd.f32 %v626, %v713
      %v715 = vpop.f32.mrb[0].mxu0
      %716 = vmatprep.mubr.bf16.mxu0 0
      %717 = vmatmul.mubr.bf16.gmra.mrb[0].mxu0 %v604
      %v718 = vpop.f32.mrb[0].mxu0
      %v719 = vadd.f32 %v626, %v718
      %v720 = vpop.f32.mrb[0].mxu0
      %v721 = vpop.f32.mrb[0].mxu0
      %v722 = vadd.f32 %v626, %v721
      %v723 = vpop.f32.mrb[0].mxu0
      %724 = vdwg.mxu0
      %v725 = vmax.f32 %v711, 0.0
      %v726 = vmax.f32 %v714, 0.0
      %v727 = vmax.f32 %v719, 0.0
      %v728 = vmax.f32 %v722, 0.0
      %v729 = vld [vmem:[%s7] sm:$0xf]
      %v730 = vld [vmem:[%s7 + $0x4] sm:$0xf]
      %v731 = vld [vmem:[%s7 + $0x8] sm:$0xf]
      %v732 = vld [vmem:[%s7 + $0xc] sm:$0xf]
      %v733 = vld [vmem:[%s7 + $0x10] sm:$0xf]
      %v734 = vld [vmem:[%s7 + $0x14] sm:$0xf]
      %v735 = vld [vmem:[%s7 + $0x18] sm:$0xf]
      %v736 = vld [vmem:[%s7 + $0x1c] sm:$0xf]
      %v737 = vld [vmem:[%s7 + $0x20] sm:$0xf]
      %v738 = vld [vmem:[%s7 + $0x24] sm:$0xf]
      %v739 = vld [vmem:[%s7 + $0x28] sm:$0xf]
      %v740 = vld [vmem:[%s7 + $0x2c] sm:$0xf]
      %v741 = vld [vmem:[%s7 + $0x30] sm:$0xf]
      %v742 = vld [vmem:[%s7 + $0x34] sm:$0xf]
      %v743 = vld [vmem:[%s7 + $0x38] sm:$0xf]
      %v744 = vld [vmem:[%s7 + $0x3c] sm:$0xf]
      %v745 = vld [vmem:[%s8] sm:$0x1]
      %v747 = vlaneseq
      %v748 = vshrl.u32 %v747, 7
      %v749 = vsub.s32 0, %v748
      %v750 = vrot.slane %v745, %v749
      %v768 = vunpack.c.l.b16 %v729
      %v769 = vunpack.c.l.b16 %v730
      %v770 = vunpack.c.l.b16 %v731
      %v771 = vunpack.c.l.b16 %v732
      %v772 = vunpack.c.l.b16 %v733
      %v773 = vunpack.c.l.b16 %v734
      %v774 = vunpack.c.l.b16 %v735
      %v775 = vunpack.c.l.b16 %v736
      %v776 = vunpack.c.l.b16 %v737
      %v777 = vunpack.c.l.b16 %v738
      %v778 = vunpack.c.l.b16 %v739
      %v779 = vunpack.c.l.b16 %v740
      %v780 = vunpack.c.l.b16 %v741
      %v781 = vunpack.c.l.b16 %v742
      %v782 = vunpack.c.l.b16 %v743
      %v783 = vunpack.c.l.b16 %v744
      %v784 = vpack.c.b16 %v769, %v768
      %v785 = vpack.c.b16 %v771, %v770
      %v786 = vpack.c.b16 %v773, %v772
      %v787 = vpack.c.b16 %v775, %v774
      %v788 = vpack.c.b16 %v777, %v776
      %v789 = vpack.c.b16 %v779, %v778
      %v790 = vpack.c.b16 %v781, %v780
      %v791 = vpack.c.b16 %v783, %v782
      %800 = vmatprep.subr.bf16.mxu0 0
      %801 = vmatpush1.bf16.msra.mxu0 %v784
      %802 = vmatprep.subr.bf16.mxu0 0
      %803 = vmatpush1.bf16.msra.mxu0 %v785
      %804 = vmatprep.subr.bf16.mxu0 0
      %805 = vmatpush1.bf16.msra.mxu0 %v786
      %806 = vmatprep.subr.bf16.mxu0 0
      %807 = vmatpush1.bf16.msra.mxu0 %v787
      %808 = vmatprep.subr.bf16.mxu0 0
      %809 = vmatpush1.bf16.msra.mxu0 %v788
      %810 = vmatprep.subr.bf16.mxu0 0
      %811 = vmatpush1.bf16.msra.mxu0 %v789
      %812 = vmatprep.subr.bf16.mxu0 0
      %813 = vmatpush1.bf16.msra.mxu0 %v790
      %814 = vmatprep.subr.bf16.mxu0 0
      %815 = vmatpush1.bf16.msra.mxu0 %v791
      %816 = vmatprep.subr.bf16.mxu0 0
      %817 = vmatpush1.bf16.msra.mxu0 0
      %818 = vmatprep.subr.bf16.mxu0 0
      %819 = vmatpush1.bf16.msra.mxu0 0
      %820 = vmatprep.subr.bf16.mxu0 0
      %821 = vmatpush1.bf16.msra.mxu0 0
      %822 = vmatprep.subr.bf16.mxu0 0
      %823 = vmatpush1.bf16.msra.mxu0 0
      %824 = vmatprep.subr.bf16.mxu0 0
      %825 = vmatpush1.bf16.msra.mxu0 0
      %826 = vmatprep.subr.bf16.mxu0 0
      %827 = vmatpush1.bf16.msra.mxu0 0
      %828 = vmatprep.subr.bf16.mxu0 0
      %829 = vmatpush1.bf16.msra.mxu0 0
      %830 = vmatprep.subr.bf16.mxu0 0
      %831 = vmatpush1.bf16.msra.mxu0 0
      %832 = vmatprep.mubr.bf16.mxu0 0
      %833 = vmatmul.mubr.bf16.gmra.mrb[0].mxu0 %v372
      %v834 = vpop.f32.mrb[0].mxu0
      %v835 = vadd.f32 %v750, %v834
      %v836 = vpop.f32.mrb[0].mxu0
      %v837 = vpop.f32.mrb[0].mxu0
      %v838 = vadd.f32 %v750, %v837
      %v839 = vpop.f32.mrb[0].mxu0
      %840 = vmatprep.mubr.bf16.mxu0 0
      %841 = vmatmul.mubr.bf16.gmra.mrb[0].mxu0 %v373
      %v842 = vpop.f32.mrb[0].mxu0
      %v843 = vadd.f32 %v750, %v842
      %v844 = vpop.f32.mrb[0].mxu0
      %v845 = vpop.f32.mrb[0].mxu0
      %v846 = vadd.f32 %v750, %v845
      %v847 = vpop.f32.mrb[0].mxu0
      %848 = vdwg.mxu0
      %v849 = vadd.f32 %v725, %v835
      %v850 = vadd.f32 %v726, %v838
      %v851 = vadd.f32 %v727, %v843
      %v852 = vadd.f32 %v728, %v846
      %853 = vst [vmem:[%s334] sm:$0xff] %v849
      %854 = vst [vmem:[%s334 + $0x8] sm:$0xff] %v850
      %855 = vst [vmem:[%s334 + $0x10] sm:$0xff] %v851
      %856 = vst [vmem:[%s334 + $0x18] sm:$0xff] %v852
      %s857 = smul.u32 4, %s20
      %p858 = scmp.lt.s32.totalorder %s857, 7
      %s859 = scalar_select %p858, %s857, 7
      %s860 = smul.addr %s859, 8
      %s861 = scalar_lea.vmem %s9, %s860
      // Predicated region
      $region57: #{ff_forward.1} parent=55 // pred_check
        %p862 = pneg %p232
      $region58: #{ff_forward.1} parent=55 // pred_check_branch
        %864 = sbr.rel (%p862) target = $region60
      $region59: #{ff_forward.1} parent=55 // pred_region
        %s865 = smul.u32 4, %s20
      $region60: #{ff_forward.1} parent=55 // pred_fallthru
        _
    $region56: #{ff_forward.1} parent=5 // pred_fallthru
      _
    %p866 = scmp.le.s32.totalorder 2, %s15
    // Predicated region
    $region61: #{ff_forward.1} parent=5 // pred_check
      %p867 = pneg %p866
    $region62: #{ff_forward.1} parent=5 // pred_check_branch
      %869 = sbr.rel (%p867) target = $region64
    $region63: #{ff_forward.1} parent=5 // pred_region
      %s870 = ssub.s32 %s15, 2
      // Predicated region
      $region65: #{ff_forward.1} parent=63 // pred_check
        %p871 = pneg %p238
      $region66: #{ff_forward.1} parent=63 // pred_check_branch
        %873 = sbr.rel (%p871) target = $region68
      $region67: #{ff_forward.1} parent=63 // pred_region
        %s874 = smul.u32 4, %s21
        %p875 = scmp.lt.s32.totalorder %s874, 7
        %s876 = scalar_select %p875, %s874, 7
        %s877 = smul.addr %s876, 8
        %s878 = scalar_lea.vmem %s9, %s877
      $region68: #{ff_forward.1} parent=63 // pred_fallthru
        _
    $region64: #{ff_forward.1} parent=5 // pred_fallthru
      _
  $region6: #{ff_forward.1} parent=0 // loop_footer
    %s19 = sadd.s32 1, %s15
  $region7: #{ff_forward.1} parent=0 // loop_footer_branch
    %14 = sbr.rel target = $region3
  $region8: #{ff_forward.1} parent=0 // loop_exit
    _

</llo_original>
